<compile_context>
chip_gen: v5e
topology: v5e:2x2
jax: 0.10.0
libtpu: 0.0.40
codegen_flags: <defaults>
</compile_context>

<pallas_src>
import functools
from types import SimpleNamespace

import jax
import jax.numpy as jnp
from jax import lax
from jax.experimental import pallas as pl
from jax.experimental.pallas import tpu as pltpu


_STRIDE = 16  # sublane-aligned per-(field, mode) row stride of the head layout


# ------------------------------ fused kernel -------------------------------
def _fused_kernel(x_ref, tx_ref, ty_ref, w1_ref, b1_ref, wh_ref, bh_ref,
                  loss_ref, traj_ref, head_ref, *, K, T, n_valid, ln,
                  pred_length, eps):
    f32 = jnp.float32

    # --- fused encoder (enc ‖ cn) + decoder-head matmuls, all kept in VMEM ---
    hc = jnp.tanh(
        jnp.dot(w1_ref[...], x_ref[...], preferred_element_type=f32)
        + b1_ref[...])                                           # (2H, LN) f32
    head_ref[...] = (jnp.dot(wh_ref[...], hc.astype(jnp.bfloat16),
                             preferred_element_type=f32)
                     + bh_ref[...])                              # (Dp, LN) f32

    tx = tx_ref[...]                                             # (T, LN)
    ty = ty_ref[...]

    def softplus(v):
        return jnp.maximum(v, 0.0) + jnp.log(1.0 + jnp.exp(-jnp.abs(v)))

    def recip(v):                       # EUP approx recip + one Newton (VALU)
        r = pl.reciprocal(v, approx=True)
        return r * (2.0 - v * r)

    def blk(i, k):                      # sublane-aligned static slice (T, LN)
        s = (i * K + k) * _STRIDE
        return head_ref[s:s + T, :]

    l2_r, fde_r, nll_r, l2b_r, nll1_r = [], [], [], [], []
    for k in range(K):                                           # K=3, static
        mx, my = blk(0, k), blk(1, k)
        dx, dy = mx - tx, my - ty
        nrm = jnp.sqrt(dx * dx + dy * dy)                        # (T, LN)
        l2_r.append(jnp.sum(nrm, axis=0, keepdims=True))         # ADE-style sum
        fde_r.append(nrm[T - 1:T, :])                            # static slice

        sx = jnp.maximum(softplus(blk(2, k)) + 1e-3, eps)
        sy = jnp.maximum(softplus(blk(3, k)) + 1e-3, eps)
        nll = (jnp.log(4.0 * sx * sy)                            # merged logs
               + jnp.abs(dx) * recip(sx) + jnp.abs(dy) * recip(sy))
        nll_r.append(jnp.sum(nll, axis=0, keepdims=True))

        # secondary (loc1, scale1) head: reg-only loss, no CE / no samples
        d1x, d1y = blk(4, k) - tx, blk(5, k) - ty
        n1 = jnp.sqrt(d1x * d1x + d1y * d1y)
        l2b_r.append(jnp.sum(n1, axis=0, keepdims=True))
        s1x = jnp.maximum(softplus(blk(6, k)) + 1e-3, eps)
        s1y = jnp.maximum(softplus(blk(7, k)) + 1e-3, eps)
        nll1 = (jnp.log(4.0 * s1x * s1y)
                + jnp.abs(d1x) * recip(s1x) + jnp.abs(d1y) * recip(s1y))
        nll1_r.append(jnp.sum(nll1, axis=0, keepdims=True))

    l2 = jnp.concatenate(l2_r, axis=0)                           # (K, LN)
    fde = jnp.concatenate(fde_r, axis=0)
    nll = jnp.concatenate(nll_r, axis=0)
    l2b = jnp.concatenate(l2b_r, axis=0)
    nll1 = jnp.concatenate(nll1_r, axis=0)

    iota_k = lax.broadcasted_iota(jnp.int32, (K, ln), 0)

    def argmin_first(v):                       # torch.argmin(dim=0) semantics
        v = jnp.where(v == v, v, jnp.inf)      # NaN guard (never selects none)
        vmin = jnp.min(v, axis=0, keepdims=True)
        cand = jnp.where(v <= vmin, iota_k, K)
        return jnp.min(cand, axis=0, keepdims=True)              # (1, LN)

    oh_ade = (iota_k == argmin_first(l2)).astype(f32)            # (K, LN)
    oh_fde = (iota_k == argmin_first(fde)).astype(f32)
    oh_1 = (iota_k == argmin_first(l2b)).astype(f32)

    lane = (lax.broadcasted_iota(jnp.int32, (1, ln), 1)
            + pl.program_id(0) * ln)
    valid = (lane < n_valid).astype(f32)                         # mask padding

    inv_reg = 1.0 / float(n_valid * T * 2)
    inv_cls = 1.0 / float(n_valid)

    reg0 = jnp.sum(oh_ade * nll, axis=0, keepdims=True) * valid * inv_reg
    reg1 = jnp.sum(oh_1 * nll1, axis=0, keepdims=True) * valid * inv_reg

    # soft-target cross entropy (primary head only; skipped for loc1/scale1)
    pi = head_ref[pl.ds(8 * K * _STRIDE, K), :]                  # (K, LN)
    st_logit = l2 * (-1.0 / float(pred_length))
    st_e = jnp.exp(st_logit - jnp.max(st_logit, axis=0, keepdims=True))
    soft_t = st_e / jnp.sum(st_e, axis=0, keepdims=True)
    pi_max = jnp.max(pi, axis=0, keepdims=True)
    lse = pi_max + jnp.log(jnp.sum(jnp.exp(pi - pi_max), axis=0, keepdims=True))
    ce = jnp.sum(-soft_t * (pi - lse), axis=0, keepdims=True)    # (1, LN)
    cls0 = ce * valid * inv_cls

    loss_ref[0] = jnp.concatenate([reg0, cls0, reg1], axis=0)    # (3, LN)

    # best-mode trajectory selection fully in VMEM; mu values are re-read
    # from head_ref (one accumulator live at a time -> no vreg spills)
    for out_idx, (field, oh) in enumerate(
            [(0, oh_ade), (1, oh_ade), (0, oh_fde), (1, oh_fde)]):
        acc = jnp.zeros((T, ln), f32)
        for k in range(K):
            acc = acc + oh[k:k + 1, :] * blk(field, k)
        traj_ref[out_idx] = acc


# ------------------------------ wrapper -------------------------------------
def _pad_head_params(wh_T, bh, K, T):
    """Zero-pad the decoder-head row layout to a sublane-aligned (stride 16)
    layout: rows (i*K+k)*16 .. +T hold field i / mode k; pi starts at 8*K*16."""
    KT = K * T

    def pad(w):
        c = w.shape[-1]
        body = w[:8 * KT].reshape(8, K, T, c)
        body = jnp.pad(body, ((0, 0), (0, 0), (0, _STRIDE - T), (0, 0)))
        body = body.reshape(8 * K * _STRIDE, c)
        pi = jnp.pad(w[8 * KT:8 * KT + K], ((0, 8 - K), (0, 0)))
        return jnp.concatenate([body, pi], axis=0)

    return pad(wh_T), pad(bh)


def _fused_ephgt_pallas(params, x_T, tx, ty, pre_obs, n_valid, args):
    K, T = args.num_modes, args.pred_length
    obs, H = args.obs_length, args.hidden_size
    f32, bf16 = jnp.float32, jnp.bfloat16
    N = n_valid
    assert K <= 8 and T <= _STRIDE

    wh_pad, bh_pad = _pad_head_params(params["wh_T"], params["bh"], K, T)
    Dp = wh_pad.shape[0]                                         # 8*K*16 + 8

    # Agent axis -> lanes (multiples of 128).  Policy: at least 2 tiles once
    # N > 128 (so v7x's two TensorCores both get work on the "parallel" axis),
    # growing to 1024-lane tiles for large N (amortize per-step overhead on
    # single-TC v5e/v6e; VMEM use stays ~2 MB per tile).
    half = pl.cdiv(N, 2)
    ln = min(1024, max(128, pl.cdiv(half, 128) * 128))
    n_pad = pl.cdiv(N, ln) * ln
    num_tiles = n_pad // ln
    pw = n_pad - N

    x_p = jnp.pad(x_T.astype(bf16), ((0, 0), (0, pw)))
    tx_p = jnp.pad(tx.astype(f32), ((0, 0), (0, pw)))
    ty_p = jnp.pad(ty.astype(f32), ((0, 0), (0, pw)))

    kern = functools.partial(_fused_kernel, K=K, T=T, n_valid=N, ln=ln,
                             pred_length=float(args.pred_length), eps=1e-6)

    grid_spec = pltpu.PrefetchScalarGridSpec(
        num_scalar_prefetch=0,
        grid=(num_tiles,),
        in_specs=[
            pl.BlockSpec((2 * obs, ln), lambda j: (0, j)),   # x features
            pl.BlockSpec((T, ln), lambda j: (0, j)),         # target x
            pl.BlockSpec((T, ln), lambda j: (0, j)),         # target y
            pl.BlockSpec((2 * H, 2 * obs), lambda j: (0, 0)),
            pl.BlockSpec((2 * H, 1), lambda j: (0, 0)),
            pl.BlockSpec((Dp, 2 * H), lambda j: (0, 0)),
            pl.BlockSpec((Dp, 1), lambda j: (0, 0)),
        ],
        out_specs=(
            pl.BlockSpec((1, 3, ln), lambda j: (j, 0, 0)),   # loss partials
            pl.BlockSpec((4, T, ln), lambda j: (0, 0, j)),   # fused trajectories
        ),
        scratch_shapes=[pltpu.VMEM((Dp, ln), f32)],          # head stays in VMEM
    )

    out_shape = (
        jax.ShapeDtypeStruct((num_tiles, 3, ln), f32),
        jax.ShapeDtypeStruct((4, T, n_pad), f32),
    )

    loss_parts, traj = pl.pallas_call(
        kern,
        out_shape=out_shape,
        grid_spec=grid_spec,
        compiler_params=pltpu.CompilerParams(
            dimension_semantics=("parallel",)),
    )(x_p, tx_p, ty_p,
      params["w1_T"].astype(bf16), params["b1"].astype(f32),
      wh_pad.astype(bf16), bh_pad.astype(f32))

    reg0 = jnp.sum(loss_parts[:, 0, :])
    cls0 = jnp.sum(loss_parts[:, 1, :])
    reg1 = jnp.sum(loss_parts[:, 2, :])
    loss0 = reg0 + cls0
    loss1 = reg1

    sample_ade = jnp.stack([traj[0, :, :N], traj[1, :, :N]], axis=-1)  # (T,N,2)
    sample_fde = jnp.stack([traj[2, :, :N], traj[3, :, :N]], axis=-1)
    full_pre_tra = [jnp.concatenate([pre_obs, sample_ade], axis=0),
                    jnp.concatenate([pre_obs, sample_fde], axis=0)]
    return (loss0, loss1), full_pre_tra


# --------------------------- parameters / forward ---------------------------
def init_params(key, args):
    H, obs = args.hidden_size, args.obs_length
    K, T = args.num_modes, args.pred_length
    KT = K * T
    # logical head row layout:
    # [mu_x | mu_y | sg_x | sg_y | l1_x | l1_y | s1_x | s1_y | pi]
    D = 8 * KT + K
    ks = jax.random.split(key, 3)
    s = 0.1
    return {
        "w1_T": (jax.random.normal(ks[0], (2 * H, 2 * obs), jnp.float32) * s
                 ).astype(jnp.bfloat16),
        "b1": jnp.zeros((2 * H, 1), jnp.float32),
        "wh_T": (jax.random.normal(ks[1], (D, 2 * H), jnp.float32) * s
                 ).astype(jnp.bfloat16),
        "bh": jax.random.normal(ks[2], (D, 1), jnp.float32) * s,
    }


def ephgt_forward(params, inputs, edge_pair, args):
    (batch_abs_gt, batch_norm_gt, _nei_list, _nei_num,
     batch_split, max_values) = inputs
    obs = args.obs_length
    N = batch_norm_gt.shape[1]

    batch_class = jnp.zeros_like(batch_abs_gt[0, :, -1]).astype(jnp.int32)  # parity (unused)
    batch_abs8 = batch_abs_gt[:8, :, :2]

    if args.input_offset:
        off = batch_norm_gt[1:obs] - batch_norm_gt[:obs - 1]
        x_tm = jnp.concatenate([jnp.zeros((1, N, 2), off.dtype), off], axis=0)
    elif args.input_position:
        x_tm = batch_norm_gt[:obs]
    else:
        # TODO(synk): input_mix path (4 features) not wired to the stand-in head.
        raise NotImplementedError("only input_offset / input_position paths")

    # feature-major (2*obs, N) layout: N lives on lanes inside the kernel
    x_T = jnp.transpose(x_tm, (2, 0, 1)).reshape(2 * obs, N)
    tx = batch_norm_gt[obs:, :, 0]                               # (pred, N)
    ty = batch_norm_gt[obs:, :, 1]
    pre_obs = batch_norm_gt[1:obs]                               # (obs-1, N, 2)

    batch_norm_abs_gt = (batch_abs8[7] / max_values[0]).astype(jnp.float32)  # parity (unused)
    priority_full = jnp.zeros((N,), jnp.float32)                             # parity (unused)
    for left, right in batch_split:
        now_pair = edge_pair[(left, right)][0]
        if now_pair.shape[0] != 0:
            # TODO(synk): HGTConv_My is not defined in the reference snippet;
            # only the empty-edge skip path (reference `else: pass`) runs here.
            pass

    (loss0, loss1), full_pre_tra = _fused_ephgt_pallas(
        params, x_T, tx, ty, pre_obs, N, args)
    return ((loss0, loss1), full_pre_tra)


# ------------------------------ pure-JAX reference ---------------------------
def _softplus_ref(v):
    return jnp.maximum(v, 0.0) + jnp.log(1.0 + jnp.exp(-jnp.abs(v)))


def _mdn_loss_ref(y, out_mu, out_sigma, out_pi, pre_obs, pred_length, ifpi,
                  eps=1e-6):
    K, N, T, _ = out_mu.shape
    l2 = jnp.sqrt(jnp.sum((out_mu - y[None]) ** 2, axis=-1)).sum(-1)  # (K, N)
    best = jnp.argmin(l2, axis=0)
    idx = jnp.arange(N)
    loc = out_mu[best, idx]
    scale = jnp.maximum(out_sigma[best, idx], eps)
    loss = jnp.mean(jnp.log(2.0 * scale) + jnp.abs(y - loc) / scale)
    if ifpi:
        soft_t = jax.nn.softmax(-l2 / pred_length, axis=0).T
        ce = jnp.mean(jnp.sum(-soft_t * jax.nn.log_softmax(out_pi, axis=-1),
                              axis=-1))
        loss = loss + ce
    sample_ade = jnp.transpose(out_mu[best, idx], (1, 0, 2))          # (T, N, 2)
    fde = jnp.sqrt(jnp.sum((out_mu[:, :, -1, :] - y[:, -1, :][None]) ** 2, -1))
    best_f = jnp.argmin(fde, axis=0)
    sample_fde = jnp.transpose(out_mu[best_f, idx], (1, 0, 2))
    fpt = [jnp.concatenate([pre_obs, sample_ade], axis=0),
           jnp.concatenate([pre_obs, sample_fde], axis=0)]
    return loss, fpt


def _ephgt_forward_ref(params, batch_norm_gt, args):
    obs, T, K = args.obs_length, args.pred_length, args.num_modes
    KT = K * T
    N = batch_norm_gt.shape[1]
    f32, bf16 = jnp.float32, jnp.bfloat16

    off = batch_norm_gt[1:obs] - batch_norm_gt[:obs - 1]
    x_tm = jnp.concatenate([jnp.zeros((1, N, 2), off.dtype), off], axis=0)
    x_flat = jnp.transpose(x_tm, (1, 2, 0)).reshape(N, 2 * obs).astype(bf16)

    w1 = params["w1_T"].astype(bf16).T
    wh = params["wh_T"].astype(bf16).T
    hc = jnp.tanh(jnp.dot(x_flat, w1, preferred_element_type=f32)
                  + params["b1"][:, 0])
    head = (jnp.dot(hc.astype(bf16), wh, preferred_element_type=f32)
            + params["bh"][:, 0])                                     # (N, D)

    def blk(i):
        return head[:, i * KT:(i + 1) * KT].reshape(N, K, T)

    def modes(xb, yb):                                                # (K,N,T,2)
        return jnp.transpose(jnp.stack([xb, yb], axis=-1), (1, 0, 2, 3))

    out_mu = modes(blk(0), blk(1))
    out_sigma = modes(_softplus_ref(blk(2)) + 1e-3, _softplus_ref(blk(3)) + 1e-3)
    loc1 = modes(blk(4), blk(5))
    scale1 = modes(_softplus_ref(blk(6)) + 1e-3, _softplus_ref(blk(7)) + 1e-3)
    out_pi = head[:, 8 * KT:8 * KT + K]                               # (N, K)

    y = jnp.transpose(batch_norm_gt[obs:], (1, 0, 2))                 # (N, T, 2)
    pre_obs = batch_norm_gt[1:obs]
    loss0, fpt = _mdn_loss_ref(y, out_mu, out_sigma, out_pi, pre_obs,
                               float(args.pred_length), ifpi=True)
    loss1, _ = _mdn_loss_ref(y, loc1, scale1, None, pre_obs,
                             float(args.pred_length), ifpi=False)
    return (loss0, loss1), fpt


if __name__ == "__main__":
    args = SimpleNamespace(hidden_size=32, obs_length=8, pred_length=12,
                           input_offset=True, input_mix=False,
                           input_position=False, ifGaussian=False, num_modes=3)
    key = jax.random.PRNGKey(0)
    k0, k1, k2 = jax.random.split(key, 3)

    N = 6
    S = args.obs_length + args.pred_length
    batch_abs_gt = jnp.concatenate(
        [jax.random.normal(k0, (S, N, 2), jnp.float32) * 5.0,
         jnp.zeros((S, N, 1), jnp.float32)], axis=-1)                # (S, N, 3)
    batch_norm_gt = jax.random.normal(k1, (S, N, 2), jnp.float32)
    max_values = jnp.array([15.0, 15.0], jnp.float32)
    batch_split = [(0, N)]
    edge_pair = {(0, N): [jnp.zeros((0, 2), jnp.int32)]}             # empty -> hgt skipped
    inputs = (batch_abs_gt, batch_norm_gt, None, None, batch_split, max_values)

    params = init_params(k2, args)
    (loss0, loss1), full_pre_tra = ephgt_forward(params, inputs, edge_pair, args)
    jax.block_until_ready((loss0, loss1, full_pre_tra))

    # correctness check of the fused Pallas path against a pure-JAX reference
    (ref0, ref1), ref_fpt = _ephgt_forward_ref(params, batch_norm_gt, args)

    S_out = args.obs_length - 1 + args.pred_length
    assert full_pre_tra[0].shape == (S_out, N, 2)
    assert full_pre_tra[1].shape == (S_out, N, 2)
    # approx-EUP reciprocal is Newton-refined in-kernel; keep a safe tolerance
    assert jnp.allclose(loss0, ref0, rtol=2e-2, atol=2e-2), (loss0, ref0)
    assert jnp.allclose(loss1, ref1, rtol=2e-2, atol=2e-2), (loss1, ref1)
    assert jnp.allclose(full_pre_tra[0], ref_fpt[0], atol=5e-3), "ADE trajectory"
    assert jnp.allclose(full_pre_tra[1], ref_fpt[1], atol=5e-3), "FDE trajectory"

    print("KERNEL_OK")
</pallas_src>

<mosaic_0001>
module attributes {stable_mosaic.version = 11 : i64} {
  func.func @_fused_kernel(%arg0: i32, %arg1: memref<16x128xbf16, #tpu.memory_space<vmem>>, %arg2: memref<12x128xf32, #tpu.memory_space<vmem>>, %arg3: memref<12x128xf32, #tpu.memory_space<vmem>>, %arg4: memref<64x16xbf16, #tpu.memory_space<vmem>>, %arg5: memref<64x1xf32, #tpu.memory_space<vmem>>, %arg6: memref<392x64xbf16, #tpu.memory_space<vmem>>, %arg7: memref<392x1xf32, #tpu.memory_space<vmem>>, %arg8: memref<1x3x128xf32, #tpu.memory_space<vmem>>, %arg9: memref<4x12x128xf32, #tpu.memory_space<vmem>>, %arg10: memref<392x128xf32, #tpu.memory_space<vmem>>) attributes {dimension_semantics = [#tpu.dimension_semantics<parallel>], iteration_bounds = array<i64: 1>, scalar_prefetch = 0 : i64, scratch_operands = 1 : i64, tpu.core_type = #tpu.core_type<tc>, window_params = [{transform_indices = @transform_0, window_bounds = array<i64: 16, 128>}, {transform_indices = @transform_1, window_bounds = array<i64: 12, 128>}, {transform_indices = @transform_2, window_bounds = array<i64: 12, 128>}, {pipeline_mode = #tpu.pipeline_mode<synchronous>, transform_indices = @transform_3, window_bounds = array<i64: 64, 16>}, {pipeline_mode = #tpu.pipeline_mode<synchronous>, transform_indices = @transform_4, window_bounds = array<i64: 64, 1>}, {pipeline_mode = #tpu.pipeline_mode<synchronous>, transform_indices = @transform_5, window_bounds = array<i64: 392, 64>}, {pipeline_mode = #tpu.pipeline_mode<synchronous>, transform_indices = @transform_6, window_bounds = array<i64: 392, 1>}, {transform_indices = @transform_7, window_bounds = array<i64: 1, 3, 128>}, {transform_indices = @transform_8, window_bounds = array<i64: 4, 12, 128>}]} {
    %c0 = arith.constant 0 : index
    %c0_0 = arith.constant 0 : index
    %0 = vector.load %arg4[%c0, %c0_0] : memref<64x16xbf16, #tpu.memory_space<vmem>>, vector<64x16xbf16>
    %c0_1 = arith.constant 0 : index
    %c0_2 = arith.constant 0 : index
    %1 = vector.load %arg1[%c0_1, %c0_2] : memref<16x128xbf16, #tpu.memory_space<vmem>>, vector<16x128xbf16>
    %cst = arith.constant dense<0.000000e+00> : vector<64x128xf32>
    %2 = tpu.matmul %0, %1, %cst {dimension_numbers = #tpu.dot_dimension_numbers<[1], [0], [0], [1], [0, 0, 1, 1], [], []>} : vector<64x16xbf16>, vector<16x128xbf16>, vector<64x128xf32> -> vector<64x128xf32>
    %c0_3 = arith.constant 0 : index
    %c0_4 = arith.constant 0 : index
    %3 = vector.load %arg5[%c0_3, %c0_4] : memref<64x1xf32, #tpu.memory_space<vmem>>, vector<64x1xf32>
    %4 = vector.broadcast %3 : vector<64x1xf32> to vector<64x128xf32>
    %5 = arith.addf %2, %4 : vector<64x128xf32>
    %6 = math.tanh %5 : vector<64x128xf32>
    %c0_5 = arith.constant 0 : index
    %c0_6 = arith.constant 0 : index
    %7 = vector.load %arg6[%c0_5, %c0_6] : memref<392x64xbf16, #tpu.memory_space<vmem>>, vector<392x64xbf16>
    %8 = arith.truncf %6 : vector<64x128xf32> to vector<64x128xbf16>
    %cst_7 = arith.constant dense<0.000000e+00> : vector<392x128xf32>
    %9 = tpu.matmul %7, %8, %cst_7 {dimension_numbers = #tpu.dot_dimension_numbers<[1], [0], [0], [1], [0, 0, 1, 1], [], []>} : vector<392x64xbf16>, vector<64x128xbf16>, vector<392x128xf32> -> vector<392x128xf32>
    %c0_8 = arith.constant 0 : index
    %c0_9 = arith.constant 0 : index
    %10 = vector.load %arg7[%c0_8, %c0_9] : memref<392x1xf32, #tpu.memory_space<vmem>>, vector<392x1xf32>
    %11 = vector.broadcast %10 : vector<392x1xf32> to vector<392x128xf32>
    %12 = arith.addf %9, %11 : vector<392x128xf32>
    %c0_10 = arith.constant 0 : index
    %c0_11 = arith.constant 0 : index
    %13 = vector.load %arg10[%c0_10, %c0_11] : memref<392x128xf32, #tpu.memory_space<vmem>>, vector<392x128xf32>
    tpu.vector_store %arg10[%c0_10, %c0_11], %12 {strides = array<i32>} : memref<392x128xf32, #tpu.memory_space<vmem>>, vector<392x128xf32>,
    %c0_12 = arith.constant 0 : index
    %c0_13 = arith.constant 0 : index
    %14 = vector.load %arg2[%c0_12, %c0_13] : memref<12x128xf32, #tpu.memory_space<vmem>>, vector<12x128xf32>
    %c0_14 = arith.constant 0 : index
    %c0_15 = arith.constant 0 : index
    %15 = vector.load %arg3[%c0_14, %c0_15] : memref<12x128xf32, #tpu.memory_space<vmem>>, vector<12x128xf32>
    %c0_16 = arith.constant 0 : index
    %c0_17 = arith.constant 0 : index
    %16 = vector.load %arg10[%c0_16, %c0_17] : memref<392x128xf32, #tpu.memory_space<vmem>>, vector<12x128xf32>
    %c48 = arith.constant 48 : index
    %c0_18 = arith.constant 0 : index
    %17 = vector.load %arg10[%c48, %c0_18] : memref<392x128xf32, #tpu.memory_space<vmem>>, vector<12x128xf32>
    %18 = arith.subf %16, %14 : vector<12x128xf32>
    %19 = arith.subf %17, %15 : vector<12x128xf32>
    %20 = arith.mulf %18, %18 : vector<12x128xf32>
    %21 = arith.mulf %19, %19 : vector<12x128xf32>
    %22 = arith.addf %20, %21 : vector<12x128xf32>
    %23 = math.sqrt %22 : vector<12x128xf32>
    %cst_19 = arith.constant dense<0.000000e+00> : vector<128xf32>
    %24 = vector.multi_reduction <add>, %23, %cst_19 [0] : vector<12x128xf32> to vector<128xf32>
    %25 = vector.shape_cast %24 : vector<128xf32> to vector<1x128xf32>
    %26 = vector.extract_strided_slice %23 {offsets = [11, 0], sizes = [1, 128], strides = [1, 1]} : vector<12x128xf32> to vector<1x128xf32>
    %c96 = arith.constant 96 : index
    %c0_20 = arith.constant 0 : index
    %27 = vector.load %arg10[%c96, %c0_20] : memref<392x128xf32, #tpu.memory_space<vmem>>, vector<12x128xf32>
    %cst_21 = arith.constant 0.000000e+00 : f32
    %28 = vector.broadcast %cst_21 : f32 to vector<12x128xf32>
    %29 = arith.maximumf %27, %28 : vector<12x128xf32>
    %30 = math.absf %27 : vector<12x128xf32>
    %cst_22 = arith.constant 0.000000e+00 : f32
    %31 = vector.broadcast %cst_22 : f32 to vector<12x128xf32>
    %32 = arith.subf %31, %30 : vector<12x128xf32>
    %33 = math.exp %32 : vector<12x128xf32>
    %cst_23 = arith.constant 1.000000e+00 : f32
    %34 = vector.broadcast %cst_23 : f32 to vector<12x128xf32>
    %35 = arith.addf %34, %33 : vector<12x128xf32>
    %36 = math.log %35 : vector<12x128xf32>
    %37 = arith.addf %29, %36 : vector<12x128xf32>
    %cst_24 = arith.constant 1.000000e-03 : f32
    %38 = vector.broadcast %cst_24 : f32 to vector<12x128xf32>
    %39 = arith.addf %37, %38 : vector<12x128xf32>
    %cst_25 = arith.constant 9.99999997E-7 : f32
    %40 = vector.broadcast %cst_25 : f32 to vector<12x128xf32>
    %41 = arith.maximumf %39, %40 : vector<12x128xf32>
    %c144 = arith.constant 144 : index
    %c0_26 = arith.constant 0 : index
    %42 = vector.load %arg10[%c144, %c0_26] : memref<392x128xf32, #tpu.memory_space<vmem>>, vector<12x128xf32>
    %cst_27 = arith.constant 0.000000e+00 : f32
    %43 = vector.broadcast %cst_27 : f32 to vector<12x128xf32>
    %44 = arith.maximumf %42, %43 : vector<12x128xf32>
    %45 = math.absf %42 : vector<12x128xf32>
    %cst_28 = arith.constant 0.000000e+00 : f32
    %46 = vector.broadcast %cst_28 : f32 to vector<12x128xf32>
    %47 = arith.subf %46, %45 : vector<12x128xf32>
    %48 = math.exp %47 : vector<12x128xf32>
    %cst_29 = arith.constant 1.000000e+00 : f32
    %49 = vector.broadcast %cst_29 : f32 to vector<12x128xf32>
    %50 = arith.addf %49, %48 : vector<12x128xf32>
    %51 = math.log %50 : vector<12x128xf32>
    %52 = arith.addf %44, %51 : vector<12x128xf32>
    %cst_30 = arith.constant 1.000000e-03 : f32
    %53 = vector.broadcast %cst_30 : f32 to vector<12x128xf32>
    %54 = arith.addf %52, %53 : vector<12x128xf32>
    %cst_31 = arith.constant 9.99999997E-7 : f32
    %55 = vector.broadcast %cst_31 : f32 to vector<12x128xf32>
    %56 = arith.maximumf %54, %55 : vector<12x128xf32>
    %cst_32 = arith.constant 4.000000e+00 : f32
    %57 = vector.broadcast %cst_32 : f32 to vector<12x128xf32>
    %58 = arith.mulf %57, %41 : vector<12x128xf32>
    %59 = arith.mulf %58, %56 : vector<12x128xf32>
    %60 = math.log %59 : vector<12x128xf32>
    %61 = math.absf %18 : vector<12x128xf32>
    %62 = tpu.reciprocal %41 {approx = true} : vector<12x128xf32> -> vector<12x128xf32>
    %63 = arith.mulf %41, %62 : vector<12x128xf32>
    %cst_33 = arith.constant 2.000000e+00 : f32
    %64 = vector.broadcast %cst_33 : f32 to vector<12x128xf32>
    %65 = arith.subf %64, %63 : vector<12x128xf32>
    %66 = arith.mulf %62, %65 : vector<12x128xf32>
    %67 = arith.mulf %61, %66 : vector<12x128xf32>
    %68 = arith.addf %60, %67 : vector<12x128xf32>
    %69 = math.absf %19 : vector<12x128xf32>
    %70 = tpu.reciprocal %56 {approx = true} : vector<12x128xf32> -> vector<12x128xf32>
    %71 = arith.mulf %56, %70 : vector<12x128xf32>
    %cst_34 = arith.constant 2.000000e+00 : f32
    %72 = vector.broadcast %cst_34 : f32 to vector<12x128xf32>
    %73 = arith.subf %72, %71 : vector<12x128xf32>
    %74 = arith.mulf %70, %73 : vector<12x128xf32>
    %75 = arith.mulf %69, %74 : vector<12x128xf32>
    %76 = arith.addf %68, %75 : vector<12x128xf32>
    %cst_35 = arith.constant dense<0.000000e+00> : vector<128xf32>
    %77 = vector.multi_reduction <add>, %76, %cst_35 [0] : vector<12x128xf32> to vector<128xf32>
    %78 = vector.shape_cast %77 : vector<128xf32> to vector<1x128xf32>
    %c192 = arith.constant 192 : index
    %c0_36 = arith.constant 0 : index
    %79 = vector.load %arg10[%c192, %c0_36] : memref<392x128xf32, #tpu.memory_space<vmem>>, vector<12x128xf32>
    %80 = arith.subf %79, %14 : vector<12x128xf32>
    %c240 = arith.constant 240 : index
    %c0_37 = arith.constant 0 : index
    %81 = vector.load %arg10[%c240, %c0_37] : memref<392x128xf32, #tpu.memory_space<vmem>>, vector<12x128xf32>
    %82 = arith.subf %81, %15 : vector<12x128xf32>
    %83 = arith.mulf %80, %80 : vector<12x128xf32>
    %84 = arith.mulf %82, %82 : vector<12x128xf32>
    %85 = arith.addf %83, %84 : vector<12x128xf32>
    %86 = math.sqrt %85 : vector<12x128xf32>
    %cst_38 = arith.constant dense<0.000000e+00> : vector<128xf32>
    %87 = vector.multi_reduction <add>, %86, %cst_38 [0] : vector<12x128xf32> to vector<128xf32>
    %88 = vector.shape_cast %87 : vector<128xf32> to vector<1x128xf32>
    %c288 = arith.constant 288 : index
    %c0_39 = arith.constant 0 : index
    %89 = vector.load %arg10[%c288, %c0_39] : memref<392x128xf32, #tpu.memory_space<vmem>>, vector<12x128xf32>
    %cst_40 = arith.constant 0.000000e+00 : f32
    %90 = vector.broadcast %cst_40 : f32 to vector<12x128xf32>
    %91 = arith.maximumf %89, %90 : vector<12x128xf32>
    %92 = math.absf %89 : vector<12x128xf32>
    %cst_41 = arith.constant 0.000000e+00 : f32
    %93 = vector.broadcast %cst_41 : f32 to vector<12x128xf32>
    %94 = arith.subf %93, %92 : vector<12x128xf32>
    %95 = math.exp %94 : vector<12x128xf32>
    %cst_42 = arith.constant 1.000000e+00 : f32
    %96 = vector.broadcast %cst_42 : f32 to vector<12x128xf32>
    %97 = arith.addf %96, %95 : vector<12x128xf32>
    %98 = math.log %97 : vector<12x128xf32>
    %99 = arith.addf %91, %98 : vector<12x128xf32>
    %cst_43 = arith.constant 1.000000e-03 : f32
    %100 = vector.broadcast %cst_43 : f32 to vector<12x128xf32>
    %101 = arith.addf %99, %100 : vector<12x128xf32>
    %cst_44 = arith.constant 9.99999997E-7 : f32
    %102 = vector.broadcast %cst_44 : f32 to vector<12x128xf32>
    %103 = arith.maximumf %101, %102 : vector<12x128xf32>
    %c336 = arith.constant 336 : index
    %c0_45 = arith.constant 0 : index
    %104 = vector.load %arg10[%c336, %c0_45] : memref<392x128xf32, #tpu.memory_space<vmem>>, vector<12x128xf32>
    %cst_46 = arith.constant 0.000000e+00 : f32
    %105 = vector.broadcast %cst_46 : f32 to vector<12x128xf32>
    %106 = arith.maximumf %104, %105 : vector<12x128xf32>
    %107 = math.absf %104 : vector<12x128xf32>
    %cst_47 = arith.constant 0.000000e+00 : f32
    %108 = vector.broadcast %cst_47 : f32 to vector<12x128xf32>
    %109 = arith.subf %108, %107 : vector<12x128xf32>
    %110 = math.exp %109 : vector<12x128xf32>
    %cst_48 = arith.constant 1.000000e+00 : f32
    %111 = vector.broadcast %cst_48 : f32 to vector<12x128xf32>
    %112 = arith.addf %111, %110 : vector<12x128xf32>
    %113 = math.log %112 : vector<12x128xf32>
    %114 = arith.addf %106, %113 : vector<12x128xf32>
    %cst_49 = arith.constant 1.000000e-03 : f32
    %115 = vector.broadcast %cst_49 : f32 to vector<12x128xf32>
    %116 = arith.addf %114, %115 : vector<12x128xf32>
    %cst_50 = arith.constant 9.99999997E-7 : f32
    %117 = vector.broadcast %cst_50 : f32 to vector<12x128xf32>
    %118 = arith.maximumf %116, %117 : vector<12x128xf32>
    %cst_51 = arith.constant 4.000000e+00 : f32
    %119 = vector.broadcast %cst_51 : f32 to vector<12x128xf32>
    %120 = arith.mulf %119, %103 : vector<12x128xf32>
    %121 = arith.mulf %120, %118 : vector<12x128xf32>
    %122 = math.log %121 : vector<12x128xf32>
    %123 = math.absf %80 : vector<12x128xf32>
    %124 = tpu.reciprocal %103 {approx = true} : vector<12x128xf32> -> vector<12x128xf32>
    %125 = arith.mulf %103, %124 : vector<12x128xf32>
    %cst_52 = arith.constant 2.000000e+00 : f32
    %126 = vector.broadcast %cst_52 : f32 to vector<12x128xf32>
    %127 = arith.subf %126, %125 : vector<12x128xf32>
    %128 = arith.mulf %124, %127 : vector<12x128xf32>
    %129 = arith.mulf %123, %128 : vector<12x128xf32>
    %130 = arith.addf %122, %129 : vector<12x128xf32>
    %131 = math.absf %82 : vector<12x128xf32>
    %132 = tpu.reciprocal %118 {approx = true} : vector<12x128xf32> -> vector<12x128xf32>
    %133 = arith.mulf %118, %132 : vector<12x128xf32>
    %cst_53 = arith.constant 2.000000e+00 : f32
    %134 = vector.broadcast %cst_53 : f32 to vector<12x128xf32>
    %135 = arith.subf %134, %133 : vector<12x128xf32>
    %136 = arith.mulf %132, %135 : vector<12x128xf32>
    %137 = arith.mulf %131, %136 : vector<12x128xf32>
    %138 = arith.addf %130, %137 : vector<12x128xf32>
    %cst_54 = arith.constant dense<0.000000e+00> : vector<128xf32>
    %139 = vector.multi_reduction <add>, %138, %cst_54 [0] : vector<12x128xf32> to vector<128xf32>
    %140 = vector.shape_cast %139 : vector<128xf32> to vector<1x128xf32>
    %c16 = arith.constant 16 : index
    %c0_55 = arith.constant 0 : index
    %141 = vector.load %arg10[%c16, %c0_55] : memref<392x128xf32, #tpu.memory_space<vmem>>, vector<12x128xf32>
    %c64 = arith.constant 64 : index
    %c0_56 = arith.constant 0 : index
    %142 = vector.load %arg10[%c64, %c0_56] : memref<392x128xf32, #tpu.memory_space<vmem>>, vector<12x128xf32>
    %143 = arith.subf %141, %14 : vector<12x128xf32>
    %144 = arith.subf %142, %15 : vector<12x128xf32>
    %145 = arith.mulf %143, %143 : vector<12x128xf32>
    %146 = arith.mulf %144, %144 : vector<12x128xf32>
    %147 = arith.addf %145, %146 : vector<12x128xf32>
    %148 = math.sqrt %147 : vector<12x128xf32>
    %cst_57 = arith.constant dense<0.000000e+00> : vector<128xf32>
    %149 = vector.multi_reduction <add>, %148, %cst_57 [0] : vector<12x128xf32> to vector<128xf32>
    %150 = vector.shape_cast %149 : vector<128xf32> to vector<1x128xf32>
    %151 = vector.extract_strided_slice %148 {offsets = [11, 0], sizes = [1, 128], strides = [1, 1]} : vector<12x128xf32> to vector<1x128xf32>
    %c112 = arith.constant 112 : index
    %c0_58 = arith.constant 0 : index
    %152 = vector.load %arg10[%c112, %c0_58] : memref<392x128xf32, #tpu.memory_space<vmem>>, vector<12x128xf32>
    %cst_59 = arith.constant 0.000000e+00 : f32
    %153 = vector.broadcast %cst_59 : f32 to vector<12x128xf32>
    %154 = arith.maximumf %152, %153 : vector<12x128xf32>
    %155 = math.absf %152 : vector<12x128xf32>
    %cst_60 = arith.constant 0.000000e+00 : f32
    %156 = vector.broadcast %cst_60 : f32 to vector<12x128xf32>
    %157 = arith.subf %156, %155 : vector<12x128xf32>
    %158 = math.exp %157 : vector<12x128xf32>
    %cst_61 = arith.constant 1.000000e+00 : f32
    %159 = vector.broadcast %cst_61 : f32 to vector<12x128xf32>
    %160 = arith.addf %159, %158 : vector<12x128xf32>
    %161 = math.log %160 : vector<12x128xf32>
    %162 = arith.addf %154, %161 : vector<12x128xf32>
    %cst_62 = arith.constant 1.000000e-03 : f32
    %163 = vector.broadcast %cst_62 : f32 to vector<12x128xf32>
    %164 = arith.addf %162, %163 : vector<12x128xf32>
    %cst_63 = arith.constant 9.99999997E-7 : f32
    %165 = vector.broadcast %cst_63 : f32 to vector<12x128xf32>
    %166 = arith.maximumf %164, %165 : vector<12x128xf32>
    %c160 = arith.constant 160 : index
    %c0_64 = arith.constant 0 : index
    %167 = vector.load %arg10[%c160, %c0_64] : memref<392x128xf32, #tpu.memory_space<vmem>>, vector<12x128xf32>
    %cst_65 = arith.constant 0.000000e+00 : f32
    %168 = vector.broadcast %cst_65 : f32 to vector<12x128xf32>
    %169 = arith.maximumf %167, %168 : vector<12x128xf32>
    %170 = math.absf %167 : vector<12x128xf32>
    %cst_66 = arith.constant 0.000000e+00 : f32
    %171 = vector.broadcast %cst_66 : f32 to vector<12x128xf32>
    %172 = arith.subf %171, %170 : vector<12x128xf32>
    %173 = math.exp %172 : vector<12x128xf32>
    %cst_67 = arith.constant 1.000000e+00 : f32
    %174 = vector.broadcast %cst_67 : f32 to vector<12x128xf32>
    %175 = arith.addf %174, %173 : vector<12x128xf32>
    %176 = math.log %175 : vector<12x128xf32>
    %177 = arith.addf %169, %176 : vector<12x128xf32>
    %cst_68 = arith.constant 1.000000e-03 : f32
    %178 = vector.broadcast %cst_68 : f32 to vector<12x128xf32>
    %179 = arith.addf %177, %178 : vector<12x128xf32>
    %cst_69 = arith.constant 9.99999997E-7 : f32
    %180 = vector.broadcast %cst_69 : f32 to vector<12x128xf32>
    %181 = arith.maximumf %179, %180 : vector<12x128xf32>
    %cst_70 = arith.constant 4.000000e+00 : f32
    %182 = vector.broadcast %cst_70 : f32 to vector<12x128xf32>
    %183 = arith.mulf %182, %166 : vector<12x128xf32>
    %184 = arith.mulf %183, %181 : vector<12x128xf32>
    %185 = math.log %184 : vector<12x128xf32>
    %186 = math.absf %143 : vector<12x128xf32>
    %187 = tpu.reciprocal %166 {approx = true} : vector<12x128xf32> -> vector<12x128xf32>
    %188 = arith.mulf %166, %187 : vector<12x128xf32>
    %cst_71 = arith.constant 2.000000e+00 : f32
    %189 = vector.broadcast %cst_71 : f32 to vector<12x128xf32>
    %190 = arith.subf %189, %188 : vector<12x128xf32>
    %191 = arith.mulf %187, %190 : vector<12x128xf32>
    %192 = arith.mulf %186, %191 : vector<12x128xf32>
    %193 = arith.addf %185, %192 : vector<12x128xf32>
    %194 = math.absf %144 : vector<12x128xf32>
    %195 = tpu.reciprocal %181 {approx = true} : vector<12x128xf32> -> vector<12x128xf32>
    %196 = arith.mulf %181, %195 : vector<12x128xf32>
    %cst_72 = arith.constant 2.000000e+00 : f32
    %197 = vector.broadcast %cst_72 : f32 to vector<12x128xf32>
    %198 = arith.subf %197, %196 : vector<12x128xf32>
    %199 = arith.mulf %195, %198 : vector<12x128xf32>
    %200 = arith.mulf %194, %199 : vector<12x128xf32>
    %201 = arith.addf %193, %200 : vector<12x128xf32>
    %cst_73 = arith.constant dense<0.000000e+00> : vector<128xf32>
    %202 = vector.multi_reduction <add>, %201, %cst_73 [0] : vector<12x128xf32> to vector<128xf32>
    %203 = vector.shape_cast %202 : vector<128xf32> to vector<1x128xf32>
    %c208 = arith.constant 208 : index
    %c0_74 = arith.constant 0 : index
    %204 = vector.load %arg10[%c208, %c0_74] : memref<392x128xf32, #tpu.memory_space<vmem>>, vector<12x128xf32>
    %205 = arith.subf %204, %14 : vector<12x128xf32>
    %c256 = arith.constant 256 : index
    %c0_75 = arith.constant 0 : index
    %206 = vector.load %arg10[%c256, %c0_75] : memref<392x128xf32, #tpu.memory_space<vmem>>, vector<12x128xf32>
    %207 = arith.subf %206, %15 : vector<12x128xf32>
    %208 = arith.mulf %205, %205 : vector<12x128xf32>
    %209 = arith.mulf %207, %207 : vector<12x128xf32>
    %210 = arith.addf %208, %209 : vector<12x128xf32>
    %211 = math.sqrt %210 : vector<12x128xf32>
    %cst_76 = arith.constant dense<0.000000e+00> : vector<128xf32>
    %212 = vector.multi_reduction <add>, %211, %cst_76 [0] : vector<12x128xf32> to vector<128xf32>
    %213 = vector.shape_cast %212 : vector<128xf32> to vector<1x128xf32>
    %c304 = arith.constant 304 : index
    %c0_77 = arith.constant 0 : index
    %214 = vector.load %arg10[%c304, %c0_77] : memref<392x128xf32, #tpu.memory_space<vmem>>, vector<12x128xf32>
    %cst_78 = arith.constant 0.000000e+00 : f32
    %215 = vector.broadcast %cst_78 : f32 to vector<12x128xf32>
    %216 = arith.maximumf %214, %215 : vector<12x128xf32>
    %217 = math.absf %214 : vector<12x128xf32>
    %cst_79 = arith.constant 0.000000e+00 : f32
    %218 = vector.broadcast %cst_79 : f32 to vector<12x128xf32>
    %219 = arith.subf %218, %217 : vector<12x128xf32>
    %220 = math.exp %219 : vector<12x128xf32>
    %cst_80 = arith.constant 1.000000e+00 : f32
    %221 = vector.broadcast %cst_80 : f32 to vector<12x128xf32>
    %222 = arith.addf %221, %220 : vector<12x128xf32>
    %223 = math.log %222 : vector<12x128xf32>
    %224 = arith.addf %216, %223 : vector<12x128xf32>
    %cst_81 = arith.constant 1.000000e-03 : f32
    %225 = vector.broadcast %cst_81 : f32 to vector<12x128xf32>
    %226 = arith.addf %224, %225 : vector<12x128xf32>
    %cst_82 = arith.constant 9.99999997E-7 : f32
    %227 = vector.broadcast %cst_82 : f32 to vector<12x128xf32>
    %228 = arith.maximumf %226, %227 : vector<12x128xf32>
    %c352 = arith.constant 352 : index
    %c0_83 = arith.constant 0 : index
    %229 = vector.load %arg10[%c352, %c0_83] : memref<392x128xf32, #tpu.memory_space<vmem>>, vector<12x128xf32>
    %cst_84 = arith.constant 0.000000e+00 : f32
    %230 = vector.broadcast %cst_84 : f32 to vector<12x128xf32>
    %231 = arith.maximumf %229, %230 : vector<12x128xf32>
    %232 = math.absf %229 : vector<12x128xf32>
    %cst_85 = arith.constant 0.000000e+00 : f32
    %233 = vector.broadcast %cst_85 : f32 to vector<12x128xf32>
    %234 = arith.subf %233, %232 : vector<12x128xf32>
    %235 = math.exp %234 : vector<12x128xf32>
    %cst_86 = arith.constant 1.000000e+00 : f32
    %236 = vector.broadcast %cst_86 : f32 to vector<12x128xf32>
    %237 = arith.addf %236, %235 : vector<12x128xf32>
    %238 = math.log %237 : vector<12x128xf32>
    %239 = arith.addf %231, %238 : vector<12x128xf32>
    %cst_87 = arith.constant 1.000000e-03 : f32
    %240 = vector.broadcast %cst_87 : f32 to vector<12x128xf32>
    %241 = arith.addf %239, %240 : vector<12x128xf32>
    %cst_88 = arith.constant 9.99999997E-7 : f32
    %242 = vector.broadcast %cst_88 : f32 to vector<12x128xf32>
    %243 = arith.maximumf %241, %242 : vector<12x128xf32>
    %cst_89 = arith.constant 4.000000e+00 : f32
    %244 = vector.broadcast %cst_89 : f32 to vector<12x128xf32>
    %245 = arith.mulf %244, %228 : vector<12x128xf32>
    %246 = arith.mulf %245, %243 : vector<12x128xf32>
    %247 = math.log %246 : vector<12x128xf32>
    %248 = math.absf %205 : vector<12x128xf32>
    %249 = tpu.reciprocal %228 {approx = true} : vector<12x128xf32> -> vector<12x128xf32>
    %250 = arith.mulf %228, %249 : vector<12x128xf32>
    %cst_90 = arith.constant 2.000000e+00 : f32
    %251 = vector.broadcast %cst_90 : f32 to vector<12x128xf32>
    %252 = arith.subf %251, %250 : vector<12x128xf32>
    %253 = arith.mulf %249, %252 : vector<12x128xf32>
    %254 = arith.mulf %248, %253 : vector<12x128xf32>
    %255 = arith.addf %247, %254 : vector<12x128xf32>
    %256 = math.absf %207 : vector<12x128xf32>
    %257 = tpu.reciprocal %243 {approx = true} : vector<12x128xf32> -> vector<12x128xf32>
    %258 = arith.mulf %243, %257 : vector<12x128xf32>
    %cst_91 = arith.constant 2.000000e+00 : f32
    %259 = vector.broadcast %cst_91 : f32 to vector<12x128xf32>
    %260 = arith.subf %259, %258 : vector<12x128xf32>
    %261 = arith.mulf %257, %260 : vector<12x128xf32>
    %262 = arith.mulf %256, %261 : vector<12x128xf32>
    %263 = arith.addf %255, %262 : vector<12x128xf32>
    %cst_92 = arith.constant dense<0.000000e+00> : vector<128xf32>
    %264 = vector.multi_reduction <add>, %263, %cst_92 [0] : vector<12x128xf32> to vector<128xf32>
    %265 = vector.shape_cast %264 : vector<128xf32> to vector<1x128xf32>
    %c32 = arith.constant 32 : index
    %c0_93 = arith.constant 0 : index
    %266 = vector.load %arg10[%c32, %c0_93] : memref<392x128xf32, #tpu.memory_space<vmem>>, vector<12x128xf32>
    %c80 = arith.constant 80 : index
    %c0_94 = arith.constant 0 : index
    %267 = vector.load %arg10[%c80, %c0_94] : memref<392x128xf32, #tpu.memory_space<vmem>>, vector<12x128xf32>
    %268 = arith.subf %266, %14 : vector<12x128xf32>
    %269 = arith.subf %267, %15 : vector<12x128xf32>
    %270 = arith.mulf %268, %268 : vector<12x128xf32>
    %271 = arith.mulf %269, %269 : vector<12x128xf32>
    %272 = arith.addf %270, %271 : vector<12x128xf32>
    %273 = math.sqrt %272 : vector<12x128xf32>
    %cst_95 = arith.constant dense<0.000000e+00> : vector<128xf32>
    %274 = vector.multi_reduction <add>, %273, %cst_95 [0] : vector<12x128xf32> to vector<128xf32>
    %275 = vector.shape_cast %274 : vector<128xf32> to vector<1x128xf32>
    %276 = vector.extract_strided_slice %273 {offsets = [11, 0], sizes = [1, 128], strides = [1, 1]} : vector<12x128xf32> to vector<1x128xf32>
    %c128 = arith.constant 128 : index
    %c0_96 = arith.constant 0 : index
    %277 = vector.load %arg10[%c128, %c0_96] : memref<392x128xf32, #tpu.memory_space<vmem>>, vector<12x128xf32>
    %cst_97 = arith.constant 0.000000e+00 : f32
    %278 = vector.broadcast %cst_97 : f32 to vector<12x128xf32>
    %279 = arith.maximumf %277, %278 : vector<12x128xf32>
    %280 = math.absf %277 : vector<12x128xf32>
    %cst_98 = arith.constant 0.000000e+00 : f32
    %281 = vector.broadcast %cst_98 : f32 to vector<12x128xf32>
    %282 = arith.subf %281, %280 : vector<12x128xf32>
    %283 = math.exp %282 : vector<12x128xf32>
    %cst_99 = arith.constant 1.000000e+00 : f32
    %284 = vector.broadcast %cst_99 : f32 to vector<12x128xf32>
    %285 = arith.addf %284, %283 : vector<12x128xf32>
    %286 = math.log %285 : vector<12x128xf32>
    %287 = arith.addf %279, %286 : vector<12x128xf32>
    %cst_100 = arith.constant 1.000000e-03 : f32
    %288 = vector.broadcast %cst_100 : f32 to vector<12x128xf32>
    %289 = arith.addf %287, %288 : vector<12x128xf32>
    %cst_101 = arith.constant 9.99999997E-7 : f32
    %290 = vector.broadcast %cst_101 : f32 to vector<12x128xf32>
    %291 = arith.maximumf %289, %290 : vector<12x128xf32>
    %c176 = arith.constant 176 : index
    %c0_102 = arith.constant 0 : index
    %292 = vector.load %arg10[%c176, %c0_102] : memref<392x128xf32, #tpu.memory_space<vmem>>, vector<12x128xf32>
    %cst_103 = arith.constant 0.000000e+00 : f32
    %293 = vector.broadcast %cst_103 : f32 to vector<12x128xf32>
    %294 = arith.maximumf %292, %293 : vector<12x128xf32>
    %295 = math.absf %292 : vector<12x128xf32>
    %cst_104 = arith.constant 0.000000e+00 : f32
    %296 = vector.broadcast %cst_104 : f32 to vector<12x128xf32>
    %297 = arith.subf %296, %295 : vector<12x128xf32>
    %298 = math.exp %297 : vector<12x128xf32>
    %cst_105 = arith.constant 1.000000e+00 : f32
    %299 = vector.broadcast %cst_105 : f32 to vector<12x128xf32>
    %300 = arith.addf %299, %298 : vector<12x128xf32>
    %301 = math.log %300 : vector<12x128xf32>
    %302 = arith.addf %294, %301 : vector<12x128xf32>
    %cst_106 = arith.constant 1.000000e-03 : f32
    %303 = vector.broadcast %cst_106 : f32 to vector<12x128xf32>
    %304 = arith.addf %302, %303 : vector<12x128xf32>
    %cst_107 = arith.constant 9.99999997E-7 : f32
    %305 = vector.broadcast %cst_107 : f32 to vector<12x128xf32>
    %306 = arith.maximumf %304, %305 : vector<12x128xf32>
    %cst_108 = arith.constant 4.000000e+00 : f32
    %307 = vector.broadcast %cst_108 : f32 to vector<12x128xf32>
    %308 = arith.mulf %307, %291 : vector<12x128xf32>
    %309 = arith.mulf %308, %306 : vector<12x128xf32>
    %310 = math.log %309 : vector<12x128xf32>
    %311 = math.absf %268 : vector<12x128xf32>
    %312 = tpu.reciprocal %291 {approx = true} : vector<12x128xf32> -> vector<12x128xf32>
    %313 = arith.mulf %291, %312 : vector<12x128xf32>
    %cst_109 = arith.constant 2.000000e+00 : f32
    %314 = vector.broadcast %cst_109 : f32 to vector<12x128xf32>
    %315 = arith.subf %314, %313 : vector<12x128xf32>
    %316 = arith.mulf %312, %315 : vector<12x128xf32>
    %317 = arith.mulf %311, %316 : vector<12x128xf32>
    %318 = arith.addf %310, %317 : vector<12x128xf32>
    %319 = math.absf %269 : vector<12x128xf32>
    %320 = tpu.reciprocal %306 {approx = true} : vector<12x128xf32> -> vector<12x128xf32>
    %321 = arith.mulf %306, %320 : vector<12x128xf32>
    %cst_110 = arith.constant 2.000000e+00 : f32
    %322 = vector.broadcast %cst_110 : f32 to vector<12x128xf32>
    %323 = arith.subf %322, %321 : vector<12x128xf32>
    %324 = arith.mulf %320, %323 : vector<12x128xf32>
    %325 = arith.mulf %319, %324 : vector<12x128xf32>
    %326 = arith.addf %318, %325 : vector<12x128xf32>
    %cst_111 = arith.constant dense<0.000000e+00> : vector<128xf32>
    %327 = vector.multi_reduction <add>, %326, %cst_111 [0] : vector<12x128xf32> to vector<128xf32>
    %328 = vector.shape_cast %327 : vector<128xf32> to vector<1x128xf32>
    %c224 = arith.constant 224 : index
    %c0_112 = arith.constant 0 : index
    %329 = vector.load %arg10[%c224, %c0_112] : memref<392x128xf32, #tpu.memory_space<vmem>>, vector<12x128xf32>
    %330 = arith.subf %329, %14 : vector<12x128xf32>
    %c272 = arith.constant 272 : index
    %c0_113 = arith.constant 0 : index
    %331 = vector.load %arg10[%c272, %c0_113] : memref<392x128xf32, #tpu.memory_space<vmem>>, vector<12x128xf32>
    %332 = arith.subf %331, %15 : vector<12x128xf32>
    %333 = arith.mulf %330, %330 : vector<12x128xf32>
    %334 = arith.mulf %332, %332 : vector<12x128xf32>
    %335 = arith.addf %333, %334 : vector<12x128xf32>
    %336 = math.sqrt %335 : vector<12x128xf32>
    %cst_114 = arith.constant dense<0.000000e+00> : vector<128xf32>
    %337 = vector.multi_reduction <add>, %336, %cst_114 [0] : vector<12x128xf32> to vector<128xf32>
    %338 = vector.shape_cast %337 : vector<128xf32> to vector<1x128xf32>
    %c320 = arith.constant 320 : index
    %c0_115 = arith.constant 0 : index
    %339 = vector.load %arg10[%c320, %c0_115] : memref<392x128xf32, #tpu.memory_space<vmem>>, vector<12x128xf32>
    %cst_116 = arith.constant 0.000000e+00 : f32
    %340 = vector.broadcast %cst_116 : f32 to vector<12x128xf32>
    %341 = arith.maximumf %339, %340 : vector<12x128xf32>
    %342 = math.absf %339 : vector<12x128xf32>
    %cst_117 = arith.constant 0.000000e+00 : f32
    %343 = vector.broadcast %cst_117 : f32 to vector<12x128xf32>
    %344 = arith.subf %343, %342 : vector<12x128xf32>
    %345 = math.exp %344 : vector<12x128xf32>
    %cst_118 = arith.constant 1.000000e+00 : f32
    %346 = vector.broadcast %cst_118 : f32 to vector<12x128xf32>
    %347 = arith.addf %346, %345 : vector<12x128xf32>
    %348 = math.log %347 : vector<12x128xf32>
    %349 = arith.addf %341, %348 : vector<12x128xf32>
    %cst_119 = arith.constant 1.000000e-03 : f32
    %350 = vector.broadcast %cst_119 : f32 to vector<12x128xf32>
    %351 = arith.addf %349, %350 : vector<12x128xf32>
    %cst_120 = arith.constant 9.99999997E-7 : f32
    %352 = vector.broadcast %cst_120 : f32 to vector<12x128xf32>
    %353 = arith.maximumf %351, %352 : vector<12x128xf32>
    %c368 = arith.constant 368 : index
    %c0_121 = arith.constant 0 : index
    %354 = vector.load %arg10[%c368, %c0_121] : memref<392x128xf32, #tpu.memory_space<vmem>>, vector<12x128xf32>
    %cst_122 = arith.constant 0.000000e+00 : f32
    %355 = vector.broadcast %cst_122 : f32 to vector<12x128xf32>
    %356 = arith.maximumf %354, %355 : vector<12x128xf32>
    %357 = math.absf %354 : vector<12x128xf32>
    %cst_123 = arith.constant 0.000000e+00 : f32
    %358 = vector.broadcast %cst_123 : f32 to vector<12x128xf32>
    %359 = arith.subf %358, %357 : vector<12x128xf32>
    %360 = math.exp %359 : vector<12x128xf32>
    %cst_124 = arith.constant 1.000000e+00 : f32
    %361 = vector.broadcast %cst_124 : f32 to vector<12x128xf32>
    %362 = arith.addf %361, %360 : vector<12x128xf32>
    %363 = math.log %362 : vector<12x128xf32>
    %364 = arith.addf %356, %363 : vector<12x128xf32>
    %cst_125 = arith.constant 1.000000e-03 : f32
    %365 = vector.broadcast %cst_125 : f32 to vector<12x128xf32>
    %366 = arith.addf %364, %365 : vector<12x128xf32>
    %cst_126 = arith.constant 9.99999997E-7 : f32
    %367 = vector.broadcast %cst_126 : f32 to vector<12x128xf32>
    %368 = arith.maximumf %366, %367 : vector<12x128xf32>
    %cst_127 = arith.constant 4.000000e+00 : f32
    %369 = vector.broadcast %cst_127 : f32 to vector<12x128xf32>
    %370 = arith.mulf %369, %353 : vector<12x128xf32>
    %371 = arith.mulf %370, %368 : vector<12x128xf32>
    %372 = math.log %371 : vector<12x128xf32>
    %373 = math.absf %330 : vector<12x128xf32>
    %374 = tpu.reciprocal %353 {approx = true} : vector<12x128xf32> -> vector<12x128xf32>
    %375 = arith.mulf %353, %374 : vector<12x128xf32>
    %cst_128 = arith.constant 2.000000e+00 : f32
    %376 = vector.broadcast %cst_128 : f32 to vector<12x128xf32>
    %377 = arith.subf %376, %375 : vector<12x128xf32>
    %378 = arith.mulf %374, %377 : vector<12x128xf32>
    %379 = arith.mulf %373, %378 : vector<12x128xf32>
    %380 = arith.addf %372, %379 : vector<12x128xf32>
    %381 = math.absf %332 : vector<12x128xf32>
    %382 = tpu.reciprocal %368 {approx = true} : vector<12x128xf32> -> vector<12x128xf32>
    %383 = arith.mulf %368, %382 : vector<12x128xf32>
    %cst_129 = arith.constant 2.000000e+00 : f32
    %384 = vector.broadcast %cst_129 : f32 to vector<12x128xf32>
    %385 = arith.subf %384, %383 : vector<12x128xf32>
    %386 = arith.mulf %382, %385 : vector<12x128xf32>
    %387 = arith.mulf %381, %386 : vector<12x128xf32>
    %388 = arith.addf %380, %387 : vector<12x128xf32>
    %cst_130 = arith.constant dense<0.000000e+00> : vector<128xf32>
    %389 = vector.multi_reduction <add>, %388, %cst_130 [0] : vector<12x128xf32> to vector<128xf32>
    %390 = vector.shape_cast %389 : vector<128xf32> to vector<1x128xf32>
    %391 = tpu.concatenate %25, %150, %275 in 0 : vector<1x128xf32>, vector<1x128xf32>, vector<1x128xf32> -> vector<3x128xf32>
    %392 = tpu.concatenate %26, %151, %276 in 0 : vector<1x128xf32>, vector<1x128xf32>, vector<1x128xf32> -> vector<3x128xf32>
    %393 = tpu.concatenate %78, %203, %328 in 0 : vector<1x128xf32>, vector<1x128xf32>, vector<1x128xf32> -> vector<3x128xf32>
    %394 = tpu.concatenate %88, %213, %338 in 0 : vector<1x128xf32>, vector<1x128xf32>, vector<1x128xf32> -> vector<3x128xf32>
    %395 = tpu.concatenate %140, %265, %390 in 0 : vector<1x128xf32>, vector<1x128xf32>, vector<1x128xf32> -> vector<3x128xf32>
    %396 = tpu.iota {dimensions = array<i32: 0>} : vector<3x128xi32>
    %397 = arith.cmpf oeq, %391, %391 : vector<3x128xf32>
    %cst_131 = arith.constant 0x7F800000 : f32
    %398 = vector.broadcast %cst_131 : f32 to vector<3x128xf32>
    %399 = arith.select %397, %391, %398 : vector<3x128xi1>, vector<3x128xf32>
    %cst_132 = arith.constant dense<0x7F800000> : vector<128xf32>
    %400 = vector.multi_reduction <minimumf>, %399, %cst_132 [0] : vector<3x128xf32> to vector<128xf32>
    %401 = vector.shape_cast %400 : vector<128xf32> to vector<1x128xf32>
    %402 = vector.broadcast %401 : vector<1x128xf32> to vector<3x128xf32>
    %403 = arith.cmpf ole, %399, %402 : vector<3x128xf32>
    %c3_i32 = arith.constant 3 : i32
    %404 = vector.broadcast %c3_i32 : i32 to vector<3x128xi32>
    %405 = arith.select %403, %396, %404 : vector<3x128xi1>, vector<3x128xi32>
    %cst_133 = arith.constant dense<2147483647> : vector<128xi32>
    %406 = vector.multi_reduction <minsi>, %405, %cst_133 [0] : vector<3x128xi32> to vector<128xi32>
    %407 = vector.shape_cast %406 : vector<128xi32> to vector<1x128xi32>
    %408 = vector.broadcast %407 : vector<1x128xi32> to vector<3x128xi32>
    %409 = arith.cmpi eq, %396, %408 : vector<3x128xi32>
    %410 = arith.extui %409 : vector<3x128xi1> to vector<3x128xi32>
    %411 = arith.sitofp %410 : vector<3x128xi32> to vector<3x128xf32>
    %412 = arith.cmpf oeq, %392, %392 : vector<3x128xf32>
    %cst_134 = arith.constant 0x7F800000 : f32
    %413 = vector.broadcast %cst_134 : f32 to vector<3x128xf32>
    %414 = arith.select %412, %392, %413 : vector<3x128xi1>, vector<3x128xf32>
    %cst_135 = arith.constant dense<0x7F800000> : vector<128xf32>
    %415 = vector.multi_reduction <minimumf>, %414, %cst_135 [0] : vector<3x128xf32> to vector<128xf32>
    %416 = vector.shape_cast %415 : vector<128xf32> to vector<1x128xf32>
    %417 = vector.broadcast %416 : vector<1x128xf32> to vector<3x128xf32>
    %418 = arith.cmpf ole, %414, %417 : vector<3x128xf32>
    %c3_i32_136 = arith.constant 3 : i32
    %419 = vector.broadcast %c3_i32_136 : i32 to vector<3x128xi32>
    %420 = arith.select %418, %396, %419 : vector<3x128xi1>, vector<3x128xi32>
    %cst_137 = arith.constant dense<2147483647> : vector<128xi32>
    %421 = vector.multi_reduction <minsi>, %420, %cst_137 [0] : vector<3x128xi32> to vector<128xi32>
    %422 = vector.shape_cast %421 : vector<128xi32> to vector<1x128xi32>
    %423 = vector.broadcast %422 : vector<1x128xi32> to vector<3x128xi32>
    %424 = arith.cmpi eq, %396, %423 : vector<3x128xi32>
    %425 = arith.extui %424 : vector<3x128xi1> to vector<3x128xi32>
    %426 = arith.sitofp %425 : vector<3x128xi32> to vector<3x128xf32>
    %427 = arith.cmpf oeq, %394, %394 : vector<3x128xf32>
    %cst_138 = arith.constant 0x7F800000 : f32
    %428 = vector.broadcast %cst_138 : f32 to vector<3x128xf32>
    %429 = arith.select %427, %394, %428 : vector<3x128xi1>, vector<3x128xf32>
    %cst_139 = arith.constant dense<0x7F800000> : vector<128xf32>
    %430 = vector.multi_reduction <minimumf>, %429, %cst_139 [0] : vector<3x128xf32> to vector<128xf32>
    %431 = vector.shape_cast %430 : vector<128xf32> to vector<1x128xf32>
    %432 = vector.broadcast %431 : vector<1x128xf32> to vector<3x128xf32>
    %433 = arith.cmpf ole, %429, %432 : vector<3x128xf32>
    %c3_i32_140 = arith.constant 3 : i32
    %434 = vector.broadcast %c3_i32_140 : i32 to vector<3x128xi32>
    %435 = arith.select %433, %396, %434 : vector<3x128xi1>, vector<3x128xi32>
    %cst_141 = arith.constant dense<2147483647> : vector<128xi32>
    %436 = vector.multi_reduction <minsi>, %435, %cst_141 [0] : vector<3x128xi32> to vector<128xi32>
    %437 = vector.shape_cast %436 : vector<128xi32> to vector<1x128xi32>
    %438 = vector.broadcast %437 : vector<1x128xi32> to vector<3x128xi32>
    %439 = arith.cmpi eq, %396, %438 : vector<3x128xi32>
    %440 = arith.extui %439 : vector<3x128xi1> to vector<3x128xi32>
    %441 = arith.sitofp %440 : vector<3x128xi32> to vector<3x128xf32>
    %442 = tpu.iota {dimensions = array<i32: 1>} : vector<1x128xi32>
    %c128_i32 = arith.constant 128 : i32
    %443 = arith.muli %arg0, %c128_i32 : i32
    %444 = vector.broadcast %443 : i32 to vector<1x128xi32>
    %445 = arith.addi %442, %444 : vector<1x128xi32>
    %c6_i32 = arith.constant 6 : i32
    %446 = vector.broadcast %c6_i32 : i32 to vector<1x128xi32>
    %447 = arith.cmpi slt, %445, %446 : vector<1x128xi32>
    %448 = arith.extui %447 : vector<1x128xi1> to vector<1x128xi32>
    %449 = arith.sitofp %448 : vector<1x128xi32> to vector<1x128xf32>
    %450 = arith.mulf %411, %393 : vector<3x128xf32>
    %cst_142 = arith.constant dense<0.000000e+00> : vector<128xf32>
    %451 = vector.multi_reduction <add>, %450, %cst_142 [0] : vector<3x128xf32> to vector<128xf32>
    %452 = vector.shape_cast %451 : vector<128xf32> to vector<1x128xf32>
    %453 = arith.mulf %452, %449 : vector<1x128xf32>
    %cst_143 = arith.constant 0.0069444445 : f32
    %454 = vector.broadcast %cst_143 : f32 to vector<1x128xf32>
    %455 = arith.mulf %453, %454 : vector<1x128xf32>
    %456 = arith.mulf %441, %395 : vector<3x128xf32>
    %cst_144 = arith.constant dense<0.000000e+00> : vector<128xf32>
    %457 = vector.multi_reduction <add>, %456, %cst_144 [0] : vector<3x128xf32> to vector<128xf32>
    %458 = vector.shape_cast %457 : vector<128xf32> to vector<1x128xf32>
    %459 = arith.mulf %458, %449 : vector<1x128xf32>
    %cst_145 = arith.constant 0.0069444445 : f32
    %460 = vector.broadcast %cst_145 : f32 to vector<1x128xf32>
    %461 = arith.mulf %459, %460 : vector<1x128xf32>
    %c384 = arith.constant 384 : index
    %c0_146 = arith.constant 0 : index
    %462 = vector.load %arg10[%c384, %c0_146] : memref<392x128xf32, #tpu.memory_space<vmem>>, vector<3x128xf32>
    %cst_147 = arith.constant -0.0833333358 : f32
    %463 = vector.broadcast %cst_147 : f32 to vector<3x128xf32>
    %464 = arith.mulf %391, %463 : vector<3x128xf32>
    %cst_148 = arith.constant dense<0xFF800000> : vector<128xf32>
    %465 = vector.multi_reduction <maximumf>, %464, %cst_148 [0] : vector<3x128xf32> to vector<128xf32>
    %466 = vector.shape_cast %465 : vector<128xf32> to vector<1x128xf32>
    %467 = vector.broadcast %466 : vector<1x128xf32> to vector<3x128xf32>
    %468 = arith.subf %464, %467 : vector<3x128xf32>
    %469 = math.exp %468 : vector<3x128xf32>
    %cst_149 = arith.constant dense<0.000000e+00> : vector<128xf32>
    %470 = vector.multi_reduction <add>, %469, %cst_149 [0] : vector<3x128xf32> to vector<128xf32>
    %471 = vector.shape_cast %470 : vector<128xf32> to vector<1x128xf32>
    %472 = vector.broadcast %471 : vector<1x128xf32> to vector<3x128xf32>
    %473 = arith.divf %469, %472 : vector<3x128xf32>
    %cst_150 = arith.constant dense<0xFF800000> : vector<128xf32>
    %474 = vector.multi_reduction <maximumf>, %462, %cst_150 [0] : vector<3x128xf32> to vector<128xf32>
    %475 = vector.shape_cast %474 : vector<128xf32> to vector<1x128xf32>
    %476 = vector.broadcast %475 : vector<1x128xf32> to vector<3x128xf32>
    %477 = arith.subf %462, %476 : vector<3x128xf32>
    %478 = math.exp %477 : vector<3x128xf32>
    %cst_151 = arith.constant dense<0.000000e+00> : vector<128xf32>
    %479 = vector.multi_reduction <add>, %478, %cst_151 [0] : vector<3x128xf32> to vector<128xf32>
    %480 = vector.shape_cast %479 : vector<128xf32> to vector<1x128xf32>
    %481 = math.log %480 : vector<1x128xf32>
    %482 = arith.addf %475, %481 : vector<1x128xf32>
    %cst_152 = arith.constant 0.000000e+00 : f32
    %483 = vector.broadcast %cst_152 : f32 to vector<3x128xf32>
    %484 = arith.subf %483, %473 : vector<3x128xf32>
    %485 = vector.broadcast %482 : vector<1x128xf32> to vector<3x128xf32>
    %486 = arith.subf %462, %485 : vector<3x128xf32>
    %487 = arith.mulf %484, %486 : vector<3x128xf32>
    %cst_153 = arith.constant dense<0.000000e+00> : vector<128xf32>
    %488 = vector.multi_reduction <add>, %487, %cst_153 [0] : vector<3x128xf32> to vector<128xf32>
    %489 = vector.shape_cast %488 : vector<128xf32> to vector<1x128xf32>
    %490 = arith.mulf %489, %449 : vector<1x128xf32>
    %cst_154 = arith.constant 0.166666672 : f32
    %491 = vector.broadcast %cst_154 : f32 to vector<1x128xf32>
    %492 = arith.mulf %490, %491 : vector<1x128xf32>
    %493 = tpu.concatenate %455, %492, %461 in 0 : vector<1x128xf32>, vector<1x128xf32>, vector<1x128xf32> -> vector<3x128xf32>
    %c0_155 = arith.constant 0 : index
    %c0_156 = arith.constant 0 : index
    %c0_157 = arith.constant 0 : index
    %494 = vector.load %arg8[%c0_155, %c0_156, %c0_157] : memref<1x3x128xf32, #tpu.memory_space<vmem>>, vector<1x3x128xf32>
    %495 = vector.shape_cast %494 : vector<1x3x128xf32> to vector<3x128xf32>
    %496 = vector.shape_cast %493 : vector<3x128xf32> to vector<1x3x128xf32>
    tpu.vector_store %arg8[%c0_155, %c0_156, %c0_157], %496 {strides = array<i32>} : memref<1x3x128xf32, #tpu.memory_space<vmem>>, vector<1x3x128xf32>,
    %cst_158 = arith.constant 0.000000e+00 : f32
    %497 = vector.broadcast %cst_158 : f32 to vector<12x128xf32>
    %498 = vector.extract_strided_slice %411 {offsets = [0, 0], sizes = [1, 128], strides = [1, 1]} : vector<3x128xf32> to vector<1x128xf32>
    %c0_159 = arith.constant 0 : index
    %c0_160 = arith.constant 0 : index
    %499 = vector.load %arg10[%c0_159, %c0_160] : memref<392x128xf32, #tpu.memory_space<vmem>>, vector<12x128xf32>
    %500 = vector.broadcast %498 : vector<1x128xf32> to vector<12x128xf32>
    %501 = arith.mulf %500, %499 : vector<12x128xf32>
    %502 = arith.addf %497, %501 : vector<12x128xf32>
    %503 = vector.extract_strided_slice %411 {offsets = [1, 0], sizes = [1, 128], strides = [1, 1]} : vector<3x128xf32> to vector<1x128xf32>
    %c16_161 = arith.constant 16 : index
    %c0_162 = arith.constant 0 : index
    %504 = vector.load %arg10[%c16_161, %c0_162] : memref<392x128xf32, #tpu.memory_space<vmem>>, vector<12x128xf32>
    %505 = vector.broadcast %503 : vector<1x128xf32> to vector<12x128xf32>
    %506 = arith.mulf %505, %504 : vector<12x128xf32>
    %507 = arith.addf %502, %506 : vector<12x128xf32>
    %508 = vector.extract_strided_slice %411 {offsets = [2, 0], sizes = [1, 128], strides = [1, 1]} : vector<3x128xf32> to vector<1x128xf32>
    %c32_163 = arith.constant 32 : index
    %c0_164 = arith.constant 0 : index
    %509 = vector.load %arg10[%c32_163, %c0_164] : memref<392x128xf32, #tpu.memory_space<vmem>>, vector<12x128xf32>
    %510 = vector.broadcast %508 : vector<1x128xf32> to vector<12x128xf32>
    %511 = arith.mulf %510, %509 : vector<12x128xf32>
    %512 = arith.addf %507, %511 : vector<12x128xf32>
    %c0_165 = arith.constant 0 : index
    %c0_166 = arith.constant 0 : index
    %c0_167 = arith.constant 0 : index
    %513 = vector.load %arg9[%c0_165, %c0_166, %c0_167] : memref<4x12x128xf32, #tpu.memory_space<vmem>>, vector<1x12x128xf32>
    %514 = vector.shape_cast %513 : vector<1x12x128xf32> to vector<12x128xf32>
    %515 = vector.shape_cast %512 : vector<12x128xf32> to vector<1x12x128xf32>
    tpu.vector_store %arg9[%c0_165, %c0_166, %c0_167], %515 {strides = array<i32>} : memref<4x12x128xf32, #tpu.memory_space<vmem>>, vector<1x12x128xf32>,
    %cst_168 = arith.constant 0.000000e+00 : f32
    %516 = vector.broadcast %cst_168 : f32 to vector<12x128xf32>
    %517 = vector.extract_strided_slice %411 {offsets = [0, 0], sizes = [1, 128], strides = [1, 1]} : vector<3x128xf32> to vector<1x128xf32>
    %c48_169 = arith.constant 48 : index
    %c0_170 = arith.constant 0 : index
    %518 = vector.load %arg10[%c48_169, %c0_170] : memref<392x128xf32, #tpu.memory_space<vmem>>, vector<12x128xf32>
    %519 = vector.broadcast %517 : vector<1x128xf32> to vector<12x128xf32>
    %520 = arith.mulf %519, %518 : vector<12x128xf32>
    %521 = arith.addf %516, %520 : vector<12x128xf32>
    %522 = vector.extract_strided_slice %411 {offsets = [1, 0], sizes = [1, 128], strides = [1, 1]} : vector<3x128xf32> to vector<1x128xf32>
    %c64_171 = arith.constant 64 : index
    %c0_172 = arith.constant 0 : index
    %523 = vector.load %arg10[%c64_171, %c0_172] : memref<392x128xf32, #tpu.memory_space<vmem>>, vector<12x128xf32>
    %524 = vector.broadcast %522 : vector<1x128xf32> to vector<12x128xf32>
    %525 = arith.mulf %524, %523 : vector<12x128xf32>
    %526 = arith.addf %521, %525 : vector<12x128xf32>
    %527 = vector.extract_strided_slice %411 {offsets = [2, 0], sizes = [1, 128], strides = [1, 1]} : vector<3x128xf32> to vector<1x128xf32>
    %c80_173 = arith.constant 80 : index
    %c0_174 = arith.constant 0 : index
    %528 = vector.load %arg10[%c80_173, %c0_174] : memref<392x128xf32, #tpu.memory_space<vmem>>, vector<12x128xf32>
    %529 = vector.broadcast %527 : vector<1x128xf32> to vector<12x128xf32>
    %530 = arith.mulf %529, %528 : vector<12x128xf32>
    %531 = arith.addf %526, %530 : vector<12x128xf32>
    %c1 = arith.constant 1 : index
    %c0_175 = arith.constant 0 : index
    %c0_176 = arith.constant 0 : index
    %532 = vector.load %arg9[%c1, %c0_175, %c0_176] : memref<4x12x128xf32, #tpu.memory_space<vmem>>, vector<1x12x128xf32>
    %533 = vector.shape_cast %532 : vector<1x12x128xf32> to vector<12x128xf32>
    %534 = vector.shape_cast %531 : vector<12x128xf32> to vector<1x12x128xf32>
    tpu.vector_store %arg9[%c1, %c0_175, %c0_176], %534 {strides = array<i32>} : memref<4x12x128xf32, #tpu.memory_space<vmem>>, vector<1x12x128xf32>,
    %cst_177 = arith.constant 0.000000e+00 : f32
    %535 = vector.broadcast %cst_177 : f32 to vector<12x128xf32>
    %536 = vector.extract_strided_slice %426 {offsets = [0, 0], sizes = [1, 128], strides = [1, 1]} : vector<3x128xf32> to vector<1x128xf32>
    %c0_178 = arith.constant 0 : index
    %c0_179 = arith.constant 0 : index
    %537 = vector.load %arg10[%c0_178, %c0_179] : memref<392x128xf32, #tpu.memory_space<vmem>>, vector<12x128xf32>
    %538 = vector.broadcast %536 : vector<1x128xf32> to vector<12x128xf32>
    %539 = arith.mulf %538, %537 : vector<12x128xf32>
    %540 = arith.addf %535, %539 : vector<12x128xf32>
    %541 = vector.extract_strided_slice %426 {offsets = [1, 0], sizes = [1, 128], strides = [1, 1]} : vector<3x128xf32> to vector<1x128xf32>
    %c16_180 = arith.constant 16 : index
    %c0_181 = arith.constant 0 : index
    %542 = vector.load %arg10[%c16_180, %c0_181] : memref<392x128xf32, #tpu.memory_space<vmem>>, vector<12x128xf32>
    %543 = vector.broadcast %541 : vector<1x128xf32> to vector<12x128xf32>
    %544 = arith.mulf %543, %542 : vector<12x128xf32>
    %545 = arith.addf %540, %544 : vector<12x128xf32>
    %546 = vector.extract_strided_slice %426 {offsets = [2, 0], sizes = [1, 128], strides = [1, 1]} : vector<3x128xf32> to vector<1x128xf32>
    %c32_182 = arith.constant 32 : index
    %c0_183 = arith.constant 0 : index
    %547 = vector.load %arg10[%c32_182, %c0_183] : memref<392x128xf32, #tpu.memory_space<vmem>>, vector<12x128xf32>
    %548 = vector.broadcast %546 : vector<1x128xf32> to vector<12x128xf32>
    %549 = arith.mulf %548, %547 : vector<12x128xf32>
    %550 = arith.addf %545, %549 : vector<12x128xf32>
    %c2 = arith.constant 2 : index
    %c0_184 = arith.constant 0 : index
    %c0_185 = arith.constant 0 : index
    %551 = vector.load %arg9[%c2, %c0_184, %c0_185] : memref<4x12x128xf32, #tpu.memory_space<vmem>>, vector<1x12x128xf32>
    %552 = vector.shape_cast %551 : vector<1x12x128xf32> to vector<12x128xf32>
    %553 = vector.shape_cast %550 : vector<12x128xf32> to vector<1x12x128xf32>
    tpu.vector_store %arg9[%c2, %c0_184, %c0_185], %553 {strides = array<i32>} : memref<4x12x128xf32, #tpu.memory_space<vmem>>, vector<1x12x128xf32>,
    %cst_186 = arith.constant 0.000000e+00 : f32
    %554 = vector.broadcast %cst_186 : f32 to vector<12x128xf32>
    %555 = vector.extract_strided_slice %426 {offsets = [0, 0], sizes = [1, 128], strides = [1, 1]} : vector<3x128xf32> to vector<1x128xf32>
    %c48_187 = arith.constant 48 : index
    %c0_188 = arith.constant 0 : index
    %556 = vector.load %arg10[%c48_187, %c0_188] : memref<392x128xf32, #tpu.memory_space<vmem>>, vector<12x128xf32>
    %557 = vector.broadcast %555 : vector<1x128xf32> to vector<12x128xf32>
    %558 = arith.mulf %557, %556 : vector<12x128xf32>
    %559 = arith.addf %554, %558 : vector<12x128xf32>
    %560 = vector.extract_strided_slice %426 {offsets = [1, 0], sizes = [1, 128], strides = [1, 1]} : vector<3x128xf32> to vector<1x128xf32>
    %c64_189 = arith.constant 64 : index
    %c0_190 = arith.constant 0 : index
    %561 = vector.load %arg10[%c64_189, %c0_190] : memref<392x128xf32, #tpu.memory_space<vmem>>, vector<12x128xf32>
    %562 = vector.broadcast %560 : vector<1x128xf32> to vector<12x128xf32>
    %563 = arith.mulf %562, %561 : vector<12x128xf32>
    %564 = arith.addf %559, %563 : vector<12x128xf32>
    %565 = vector.extract_strided_slice %426 {offsets = [2, 0], sizes = [1, 128], strides = [1, 1]} : vector<3x128xf32> to vector<1x128xf32>
    %c80_191 = arith.constant 80 : index
    %c0_192 = arith.constant 0 : index
    %566 = vector.load %arg10[%c80_191, %c0_192] : memref<392x128xf32, #tpu.memory_space<vmem>>, vector<12x128xf32>
    %567 = vector.broadcast %565 : vector<1x128xf32> to vector<12x128xf32>
    %568 = arith.mulf %567, %566 : vector<12x128xf32>
    %569 = arith.addf %564, %568 : vector<12x128xf32>
    %c3 = arith.constant 3 : index
    %c0_193 = arith.constant 0 : index
    %c0_194 = arith.constant 0 : index
    %570 = vector.load %arg9[%c3, %c0_193, %c0_194] : memref<4x12x128xf32, #tpu.memory_space<vmem>>, vector<1x12x128xf32>
    %571 = vector.shape_cast %570 : vector<1x12x128xf32> to vector<12x128xf32>
    %572 = vector.shape_cast %569 : vector<12x128xf32> to vector<1x12x128xf32>
    tpu.vector_store %arg9[%c3, %c0_193, %c0_194], %572 {strides = array<i32>} : memref<4x12x128xf32, #tpu.memory_space<vmem>>, vector<1x12x128xf32>,
    return
  }
  func.func @transform_0(%arg0: i32) -> (i32, i32) {
    %c0_i32 = arith.constant 0 : i32
    %c0_i32_0 = arith.constant 0 : i32
    return %c0_i32, %arg0 : i32, i32
  }
  func.func @transform_1(%arg0: i32) -> (i32, i32) {
    %c0_i32 = arith.constant 0 : i32
    %c0_i32_0 = arith.constant 0 : i32
    return %c0_i32, %arg0 : i32, i32
  }
  func.func @transform_2(%arg0: i32) -> (i32, i32) {
    %c0_i32 = arith.constant 0 : i32
    %c0_i32_0 = arith.constant 0 : i32
    return %c0_i32, %arg0 : i32, i32
  }
  func.func @transform_3(%arg0: i32) -> (i32, i32) {
    %c0_i32 = arith.constant 0 : i32
    %c0_i32_0 = arith.constant 0 : i32
    %c0_i32_1 = arith.constant 0 : i32
    return %c0_i32, %c0_i32_0 : i32, i32
  }
  func.func @transform_4(%arg0: i32) -> (i32, i32) {
    %c0_i32 = arith.constant 0 : i32
    %c0_i32_0 = arith.constant 0 : i32
    %c0_i32_1 = arith.constant 0 : i32
    return %c0_i32, %c0_i32_0 : i32, i32
  }
  func.func @transform_5(%arg0: i32) -> (i32, i32) {
    %c0_i32 = arith.constant 0 : i32
    %c0_i32_0 = arith.constant 0 : i32
    %c0_i32_1 = arith.constant 0 : i32
    return %c0_i32, %c0_i32_0 : i32, i32
  }
  func.func @transform_6(%arg0: i32) -> (i32, i32) {
    %c0_i32 = arith.constant 0 : i32
    %c0_i32_0 = arith.constant 0 : i32
    %c0_i32_1 = arith.constant 0 : i32
    return %c0_i32, %c0_i32_0 : i32, i32
  }
  func.func @transform_7(%arg0: i32) -> (i32, i32, i32) {
    %c0_i32 = arith.constant 0 : i32
    %c0_i32_0 = arith.constant 0 : i32
    %c0_i32_1 = arith.constant 0 : i32
    return %arg0, %c0_i32, %c0_i32_0 : i32, i32, i32
  }
  func.func @transform_8(%arg0: i32) -> (i32, i32, i32) {
    %c0_i32 = arith.constant 0 : i32
    %c0_i32_0 = arith.constant 0 : i32
    %c0_i32_1 = arith.constant 0 : i32
    return %c0_i32, %c0_i32_0, %arg0 : i32, i32, i32
  }
}

</mosaic_0001>

<llo_original>
// kernel: tpu_custom_call.1
$region0: #{tpu_custom_call.1}
  #allocation0 [shape = 'u32[]', space=smem, size = 0x4, offset = 0x4, fixed_abs, tag = 'smem constant byte address 0x4 - core index']
  #allocation1 [shape = 'u32[72,128]{1,0:T(1,128)}', space=vmem, size = 0x9000, scoped, tag = 'internal scratch']
  #allocation2 [shape = 'f32[392,128]{1,0:T(8,128)}', space=vmem, size = 0x31000, scoped, tag = 'scratch operand']
  %s0 = inlined_call_operand.vmem [shape: bf16[16,128], index: 0, kind: input, shape index: {}]
  %s1 = inlined_call_operand.vmem [shape: f32[12,128], index: 1, kind: input, shape index: {}]
  %s2 = inlined_call_operand.vmem [shape: f32[12,128], index: 2, kind: input, shape index: {}]
  %s3 = inlined_call_operand.vmem [shape: bf16[64,16], index: 3, kind: input, shape index: {}]
  %s4 = inlined_call_operand.vmem [shape: f32[64,1], index: 4, kind: input, shape index: {}]
  %s5 = inlined_call_operand.vmem [shape: bf16[392,64], index: 5, kind: input, shape index: {}]
  %s6 = inlined_call_operand.vmem [shape: f32[392,1], index: 6, kind: input, shape index: {}]
  %s7 = inlined_call_operand.vmem [shape: f32[1,3,128], index: 7, kind: output, shape index: {0}]
  %s8 = inlined_call_operand.vmem [shape: f32[4,12,128], index: 8, kind: output, shape index: {1}]
  %9 = xla_tuple %s7, %s8
  %s10 = sld [smem:[#allocation0]]
  $region46: #{tpu_custom_call.1} parent=0
    _
  %s12 = ssub.s32 1, %s10
  %s13 = scalar_select 0, %s12, %s10
  // Predicated region
  $region2: #{tpu_custom_call.1} parent=0 // pred_check
    _
  $region3: #{tpu_custom_call.1} parent=0 // pred_check_branch
    %15 = sbr.rel (0) target = $region5
  $region4: #{tpu_custom_call.1} parent=0 // pred_region
    _
  $region5: #{tpu_custom_call.1} parent=0 // pred_fallthru
    _
  // Predicated region
  $region6: #{tpu_custom_call.1} parent=0 // pred_check
    _
  $region7: #{tpu_custom_call.1} parent=0 // pred_check_branch
    %17 = sbr.rel (0) target = $region9
  $region8: #{tpu_custom_call.1} parent=0 // pred_region
    _
  $region9: #{tpu_custom_call.1} parent=0 // pred_fallthru
    _
  // Predicated region
  $region10: #{tpu_custom_call.1} parent=0 // pred_check
    _
  $region11: #{tpu_custom_call.1} parent=0 // pred_check_branch
    %19 = sbr.rel (0) target = $region13
  $region12: #{tpu_custom_call.1} parent=0 // pred_region
    _
  $region13: #{tpu_custom_call.1} parent=0 // pred_fallthru
    _
  // Predicated region
  $region14: #{tpu_custom_call.1} parent=0 // pred_check
    _
  $region15: #{tpu_custom_call.1} parent=0 // pred_check_branch
    %21 = sbr.rel (0) target = $region17
  $region16: #{tpu_custom_call.1} parent=0 // pred_region
    _
  $region17: #{tpu_custom_call.1} parent=0 // pred_fallthru
    _
  // Predicated region
  $region18: #{tpu_custom_call.1} parent=0 // pred_check
    _
  $region19: #{tpu_custom_call.1} parent=0 // pred_check_branch
    %23 = sbr.rel (0) target = $region21
  $region20: #{tpu_custom_call.1} parent=0 // pred_region
    _
  $region21: #{tpu_custom_call.1} parent=0 // pred_fallthru
    _
  // Predicated region
  $region22: #{tpu_custom_call.1} parent=0 // pred_check
    _
  $region23: #{tpu_custom_call.1} parent=0 // pred_check_branch
    %25 = sbr.rel (0) target = $region25
  $region24: #{tpu_custom_call.1} parent=0 // pred_region
    _
  $region25: #{tpu_custom_call.1} parent=0 // pred_fallthru
    _
  // Predicated region
  $region26: #{tpu_custom_call.1} parent=0 // pred_check
    _
  $region27: #{tpu_custom_call.1} parent=0 // pred_check_branch
    %27 = sbr.rel (0) target = $region29
  $region28: #{tpu_custom_call.1} parent=0 // pred_region
    _
  $region29: #{tpu_custom_call.1} parent=0 // pred_fallthru
    _
  %v29 = vld [vmem:[%s3] sm:$0xf]
  %v30 = vld [vmem:[%s3 + $0x4] sm:$0xf]
  %v31 = vld [vmem:[%s3 + $0x8] sm:$0xf]
  %v32 = vld [vmem:[%s3 + $0xc] sm:$0xf]
  %v33 = vld [vmem:[%s3 + $0x10] sm:$0xf]
  %v34 = vld [vmem:[%s3 + $0x14] sm:$0xf]
  %v35 = vld [vmem:[%s3 + $0x18] sm:$0xf]
  %v36 = vld [vmem:[%s3 + $0x1c] sm:$0xf]
  %v37 = vld [vmem:[%s0] sm:$0xf]
  %v38 = vld [vmem:[%s0 + $0x4] sm:$0xf]
  %v39 = vld [vmem:[%s4] sm:$0xff]
  %v40 = vld [vmem:[%s4 + $0x8] sm:$0xff]
  %v41 = vld [vmem:[%s4 + $0x10] sm:$0xff]
  %v42 = vld [vmem:[%s4 + $0x18] sm:$0xff]
  %v43 = vld [vmem:[%s4 + $0x20] sm:$0xff]
  %v44 = vld [vmem:[%s4 + $0x28] sm:$0xff]
  %v45 = vld [vmem:[%s4 + $0x30] sm:$0xff]
  %v46 = vld [vmem:[%s4 + $0x38] sm:$0xff]
  %48 = vset.pattern.permute.xlu0 0
  %49 = vperm.xlu0 %48, %v39
  %v50 = vpop.permute.xlu0 %49
  %53 = vset.pattern.permute.xlu0 0
  %54 = vperm.xlu0 %53, %v40
  %v55 = vpop.permute.xlu0 %54
  %58 = vset.pattern.permute.xlu0 0
  %59 = vperm.xlu0 %58, %v41
  %v60 = vpop.permute.xlu0 %59
  %63 = vset.pattern.permute.xlu0 0
  %64 = vperm.xlu0 %63, %v42
  %v65 = vpop.permute.xlu0 %64
  %68 = vset.pattern.permute.xlu0 0
  %69 = vperm.xlu0 %68, %v43
  %v70 = vpop.permute.xlu0 %69
  %73 = vset.pattern.permute.xlu0 0
  %74 = vperm.xlu0 %73, %v44
  %v75 = vpop.permute.xlu0 %74
  %78 = vset.pattern.permute.xlu0 0
  %79 = vperm.xlu0 %78, %v45
  %v80 = vpop.permute.xlu0 %79
  %83 = vset.pattern.permute.xlu0 0
  %84 = vperm.xlu0 %83, %v46
  %v85 = vpop.permute.xlu0 %84
  %v95 = vunpack.c.l.b16 %v29
  %v96 = vunpack.c.l.b16 %v30
  %v97 = vunpack.c.l.b16 %v31
  %v98 = vunpack.c.l.b16 %v32
  %v99 = vunpack.c.l.b16 %v33
  %v100 = vunpack.c.l.b16 %v34
  %v101 = vunpack.c.l.b16 %v35
  %v102 = vunpack.c.l.b16 %v36
  %v103 = vpack.c.b16 %v96, %v95
  %v104 = vpack.c.b16 %v98, %v97
  %v105 = vpack.c.b16 %v100, %v99
  %v106 = vpack.c.b16 %v102, %v101
  %v109 = vunpack.c.l.b16 %v37
  %v110 = vunpack.c.l.b16 %v38
  %v111 = vpack.c.b16 %v110, %v109
  %vm113 = vcmask 130048
  %v115 = vsel %vm113, %v103, 0
  %v118 = vsel %vm113, %v104, 0
  %v121 = vsel %vm113, %v105, 0
  %v124 = vsel %vm113, %v106, 0
  %126 = vmatpush.bf16.msra.mxu0 0
  %127 = vmatpush.bf16.msra.mxu0 0
  %128 = vmatpush.bf16.msra.mxu0 0
  %129 = vmatpush.bf16.msra.mxu0 0
  %130 = vmatpush.bf16.msra.mxu0 0
  %131 = vmatpush.bf16.msra.mxu0 0
  %132 = vmatpush.bf16.msra.mxu0 0
  %133 = vmatpush.bf16.msra.mxu0 %v111
  %134 = vmatmul.bf16.gmra.mxu0 %v115
  %v135 = vpop.f32.mrf.mxu0
  %v136 = vadd.f32 %v50, %v135
  %v137 = vpop.f32.mrf.mxu0
  %v138 = vadd.f32 %v55, %v137
  %139 = vmatmul.bf16.gmra.mxu0 %v118
  %v140 = vpop.f32.mrf.mxu0
  %v141 = vadd.f32 %v60, %v140
  %v142 = vpop.f32.mrf.mxu0
  %v143 = vadd.f32 %v65, %v142
  %144 = vmatmul.bf16.gmra.mxu0 %v121
  %v145 = vpop.f32.mrf.mxu0
  %v146 = vadd.f32 %v70, %v145
  %v147 = vpop.f32.mrf.mxu0
  %v148 = vadd.f32 %v75, %v147
  %149 = vmatmul.bf16.gmra.mxu0 %v124
  %v150 = vpop.f32.mrf.mxu0
  %v151 = vadd.f32 %v80, %v150
  %v152 = vpop.f32.mrf.mxu0
  %v153 = vadd.f32 %v85, %v152
  %154 = vdwg.mxu0
  %v155 = vtanh.pop %v136
  %v156 = vtanh.pop %v138
  %v157 = vtanh.pop %v141
  %v158 = vtanh.pop %v143
  %v159 = vtanh.pop %v146
  %v160 = vtanh.pop %v148
  %v161 = vtanh.pop %v151
  %v162 = vtanh.pop %v153
  %v163 = vld [vmem:[%s5] sm:$0xf]
  %v164 = vld [vmem:[%s5 + $0x4] sm:$0xf]
  %v165 = vld [vmem:[%s5 + $0x8] sm:$0xf]
  %v166 = vld [vmem:[%s5 + $0xc] sm:$0xf]
  %v167 = vld [vmem:[%s5 + $0x10] sm:$0xf]
  %v168 = vld [vmem:[%s5 + $0x14] sm:$0xf]
  %v169 = vld [vmem:[%s5 + $0x18] sm:$0xf]
  %v170 = vld [vmem:[%s5 + $0x1c] sm:$0xf]
  %v171 = vld [vmem:[%s5 + $0x20] sm:$0xf]
  %v172 = vld [vmem:[%s5 + $0x24] sm:$0xf]
  %v173 = vld [vmem:[%s5 + $0x28] sm:$0xf]
  %v174 = vld [vmem:[%s5 + $0x2c] sm:$0xf]
  %v175 = vld [vmem:[%s5 + $0x30] sm:$0xf]
  %v176 = vld [vmem:[%s5 + $0x34] sm:$0xf]
  %v177 = vld [vmem:[%s5 + $0x38] sm:$0xf]
  %v178 = vld [vmem:[%s5 + $0x3c] sm:$0xf]
  %v179 = vld [vmem:[%s5 + $0x40] sm:$0xf]
  %v180 = vld [vmem:[%s5 + $0x44] sm:$0xf]
  %v181 = vld [vmem:[%s5 + $0x48] sm:$0xf]
  %v182 = vld [vmem:[%s5 + $0x4c] sm:$0xf]
  %v183 = vld [vmem:[%s5 + $0x50] sm:$0xf]
  %v184 = vld [vmem:[%s5 + $0x54] sm:$0xf]
  %v185 = vld [vmem:[%s5 + $0x58] sm:$0xf]
  %v186 = vld [vmem:[%s5 + $0x5c] sm:$0xf]
  %v187 = vld [vmem:[%s5 + $0x60] sm:$0xf]
  %v188 = vld [vmem:[%s5 + $0x64] sm:$0xf]
  %v189 = vld [vmem:[%s5 + $0x68] sm:$0xf]
  %v190 = vld [vmem:[%s5 + $0x6c] sm:$0xf]
  %v191 = vld [vmem:[%s5 + $0x70] sm:$0xf]
  %v192 = vld [vmem:[%s5 + $0x74] sm:$0xf]
  %v193 = vld [vmem:[%s5 + $0x78] sm:$0xf]
  %v194 = vld [vmem:[%s5 + $0x7c] sm:$0xf]
  %v195 = vld [vmem:[%s5 + $0x80] sm:$0xf]
  %v196 = vld [vmem:[%s5 + $0x84] sm:$0xf]
  %v197 = vld [vmem:[%s5 + $0x88] sm:$0xf]
  %v198 = vld [vmem:[%s5 + $0x8c] sm:$0xf]
  %v199 = vld [vmem:[%s5 + $0x90] sm:$0xf]
  %v200 = vld [vmem:[%s5 + $0x94] sm:$0xf]
  %v201 = vld [vmem:[%s5 + $0x98] sm:$0xf]
  %v202 = vld [vmem:[%s5 + $0x9c] sm:$0xf]
  %v203 = vld [vmem:[%s5 + $0xa0] sm:$0xf]
  %v204 = vld [vmem:[%s5 + $0xa4] sm:$0xf]
  %v205 = vld [vmem:[%s5 + $0xa8] sm:$0xf]
  %v206 = vld [vmem:[%s5 + $0xac] sm:$0xf]
  %v207 = vld [vmem:[%s5 + $0xb0] sm:$0xf]
  %v208 = vld [vmem:[%s5 + $0xb4] sm:$0xf]
  %v209 = vld [vmem:[%s5 + $0xb8] sm:$0xf]
  %v210 = vld [vmem:[%s5 + $0xbc] sm:$0xf]
  %v211 = vld [vmem:[%s5 + $0xc0] sm:$0xf]
  %v212 = vpack.c.bf16 %v156, %v155
  %v213 = vpack.c.bf16 %v158, %v157
  %v214 = vpack.c.bf16 %v160, %v159
  %v215 = vpack.c.bf16 %v162, %v161
  %v216 = vld [vmem:[%s6] sm:$0xff]
  %v217 = vld [vmem:[%s6 + $0x8] sm:$0xff]
  %v218 = vld [vmem:[%s6 + $0x10] sm:$0xff]
  %v219 = vld [vmem:[%s6 + $0x18] sm:$0xff]
  %v220 = vld [vmem:[%s6 + $0x20] sm:$0xff]
  %v221 = vld [vmem:[%s6 + $0x28] sm:$0xff]
  %v222 = vld [vmem:[%s6 + $0x30] sm:$0xff]
  %v223 = vld [vmem:[%s6 + $0x38] sm:$0xff]
  %v224 = vld [vmem:[%s6 + $0x40] sm:$0xff]
  %v225 = vld [vmem:[%s6 + $0x48] sm:$0xff]
  %v226 = vld [vmem:[%s6 + $0x50] sm:$0xff]
  %v227 = vld [vmem:[%s6 + $0x58] sm:$0xff]
  %v228 = vld [vmem:[%s6 + $0x60] sm:$0xff]
  %v229 = vld [vmem:[%s6 + $0x68] sm:$0xff]
  %v230 = vld [vmem:[%s6 + $0x70] sm:$0xff]
  %v231 = vld [vmem:[%s6 + $0x78] sm:$0xff]
  %v232 = vld [vmem:[%s6 + $0x80] sm:$0xff]
  %v233 = vld [vmem:[%s6 + $0x88] sm:$0xff]
  %v234 = vld [vmem:[%s6 + $0x90] sm:$0xff]
  %v235 = vld [vmem:[%s6 + $0x98] sm:$0xff]
  %v236 = vld [vmem:[%s6 + $0xa0] sm:$0xff]
  %v237 = vld [vmem:[%s6 + $0xa8] sm:$0xff]
  %v238 = vld [vmem:[%s6 + $0xb0] sm:$0xff]
  %v239 = vld [vmem:[%s6 + $0xb8] sm:$0xff]
  %v240 = vld [vmem:[%s6 + $0xc0] sm:$0xff]
  %v241 = vld [vmem:[%s6 + $0xc8] sm:$0xff]
  %v242 = vld [vmem:[%s6 + $0xd0] sm:$0xff]
  %v243 = vld [vmem:[%s6 + $0xd8] sm:$0xff]
  %v244 = vld [vmem:[%s6 + $0xe0] sm:$0xff]
  %v245 = vld [vmem:[%s6 + $0xe8] sm:$0xff]
  %v246 = vld [vmem:[%s6 + $0xf0] sm:$0xff]
  %v247 = vld [vmem:[%s6 + $0xf8] sm:$0xff]
  %v248 = vld [vmem:[%s6 + $0x100] sm:$0xff]
  %v249 = vld [vmem:[%s6 + $0x108] sm:$0xff]
  %v250 = vld [vmem:[%s6 + $0x110] sm:$0xff]
  %v251 = vld [vmem:[%s6 + $0x118] sm:$0xff]
  %v252 = vld [vmem:[%s6 + $0x120] sm:$0xff]
  %v253 = vld [vmem:[%s6 + $0x128] sm:$0xff]
  %v254 = vld [vmem:[%s6 + $0x130] sm:$0xff]
  %v255 = vld [vmem:[%s6 + $0x138] sm:$0xff]
  %v256 = vld [vmem:[%s6 + $0x140] sm:$0xff]
  %v257 = vld [vmem:[%s6 + $0x148] sm:$0xff]
  %v258 = vld [vmem:[%s6 + $0x150] sm:$0xff]
  %v259 = vld [vmem:[%s6 + $0x158] sm:$0xff]
  %v260 = vld [vmem:[%s6 + $0x160] sm:$0xff]
  %v261 = vld [vmem:[%s6 + $0x168] sm:$0xff]
  %v262 = vld [vmem:[%s6 + $0x170] sm:$0xff]
  %v263 = vld [vmem:[%s6 + $0x178] sm:$0xff]
  %v264 = vld [vmem:[%s6 + $0x180] sm:$0xff]
  %266 = vset.pattern.permute.xlu0 0
  %267 = vperm.xlu0 %266, %v216
  %v268 = vpop.permute.xlu0 %267
  %271 = vset.pattern.permute.xlu0 0
  %272 = vperm.xlu0 %271, %v217
  %v273 = vpop.permute.xlu0 %272
  %276 = vset.pattern.permute.xlu0 0
  %277 = vperm.xlu0 %276, %v218
  %v278 = vpop.permute.xlu0 %277
  %281 = vset.pattern.permute.xlu0 0
  %282 = vperm.xlu0 %281, %v219
  %v283 = vpop.permute.xlu0 %282
  %286 = vset.pattern.permute.xlu0 0
  %287 = vperm.xlu0 %286, %v220
  %v288 = vpop.permute.xlu0 %287
  %291 = vset.pattern.permute.xlu0 0
  %292 = vperm.xlu0 %291, %v221
  %v293 = vpop.permute.xlu0 %292
  %296 = vset.pattern.permute.xlu0 0
  %297 = vperm.xlu0 %296, %v222
  %v298 = vpop.permute.xlu0 %297
  %301 = vset.pattern.permute.xlu0 0
  %302 = vperm.xlu0 %301, %v223
  %v303 = vpop.permute.xlu0 %302
  %306 = vset.pattern.permute.xlu0 0
  %307 = vperm.xlu0 %306, %v224
  %v308 = vpop.permute.xlu0 %307
  %311 = vset.pattern.permute.xlu0 0
  %312 = vperm.xlu0 %311, %v225
  %v313 = vpop.permute.xlu0 %312
  %316 = vset.pattern.permute.xlu0 0
  %317 = vperm.xlu0 %316, %v226
  %v318 = vpop.permute.xlu0 %317
  %321 = vset.pattern.permute.xlu0 0
  %322 = vperm.xlu0 %321, %v227
  %v323 = vpop.permute.xlu0 %322
  %326 = vset.pattern.permute.xlu0 0
  %327 = vperm.xlu0 %326, %v228
  %v328 = vpop.permute.xlu0 %327
  %331 = vset.pattern.permute.xlu0 0
  %332 = vperm.xlu0 %331, %v229
  %v333 = vpop.permute.xlu0 %332
  %336 = vset.pattern.permute.xlu0 0
  %337 = vperm.xlu0 %336, %v230
  %v338 = vpop.permute.xlu0 %337
  %341 = vset.pattern.permute.xlu0 0
  %342 = vperm.xlu0 %341, %v231
  %v343 = vpop.permute.xlu0 %342
  %346 = vset.pattern.permute.xlu0 0
  %347 = vperm.xlu0 %346, %v232
  %v348 = vpop.permute.xlu0 %347
  %351 = vset.pattern.permute.xlu0 0
  %352 = vperm.xlu0 %351, %v233
  %v353 = vpop.permute.xlu0 %352
  %356 = vset.pattern.permute.xlu0 0
  %357 = vperm.xlu0 %356, %v234
  %v358 = vpop.permute.xlu0 %357
  %361 = vset.pattern.permute.xlu0 0
  %362 = vperm.xlu0 %361, %v235
  %v363 = vpop.permute.xlu0 %362
  %366 = vset.pattern.permute.xlu0 0
  %367 = vperm.xlu0 %366, %v236
  %v368 = vpop.permute.xlu0 %367
  %371 = vset.pattern.permute.xlu0 0
  %372 = vperm.xlu0 %371, %v237
  %v373 = vpop.permute.xlu0 %372
  %376 = vset.pattern.permute.xlu0 0
  %377 = vperm.xlu0 %376, %v238
  %v378 = vpop.permute.xlu0 %377
  %381 = vset.pattern.permute.xlu0 0
  %382 = vperm.xlu0 %381, %v239
  %v383 = vpop.permute.xlu0 %382
  %386 = vset.pattern.permute.xlu0 0
  %387 = vperm.xlu0 %386, %v240
  %v388 = vpop.permute.xlu0 %387
  %391 = vset.pattern.permute.xlu0 0
  %392 = vperm.xlu0 %391, %v241
  %v393 = vpop.permute.xlu0 %392
  %396 = vset.pattern.permute.xlu0 0
  %397 = vperm.xlu0 %396, %v242
  %v398 = vpop.permute.xlu0 %397
  %401 = vset.pattern.permute.xlu0 0
  %402 = vperm.xlu0 %401, %v243
  %v403 = vpop.permute.xlu0 %402
  %406 = vset.pattern.permute.xlu0 0
  %407 = vperm.xlu0 %406, %v244
  %v408 = vpop.permute.xlu0 %407
  %411 = vset.pattern.permute.xlu0 0
  %412 = vperm.xlu0 %411, %v245
  %v413 = vpop.permute.xlu0 %412
  %416 = vset.pattern.permute.xlu0 0
  %417 = vperm.xlu0 %416, %v246
  %v418 = vpop.permute.xlu0 %417
  %421 = vset.pattern.permute.xlu0 0
  %422 = vperm.xlu0 %421, %v247
  %v423 = vpop.permute.xlu0 %422
  %426 = vset.pattern.permute.xlu0 0
  %427 = vperm.xlu0 %426, %v248
  %v428 = vpop.permute.xlu0 %427
  %431 = vset.pattern.permute.xlu0 0
  %432 = vperm.xlu0 %431, %v249
  %v433 = vpop.permute.xlu0 %432
  %436 = vset.pattern.permute.xlu0 0
  %437 = vperm.xlu0 %436, %v250
  %v438 = vpop.permute.xlu0 %437
  %441 = vset.pattern.permute.xlu0 0
  %442 = vperm.xlu0 %441, %v251
  %v443 = vpop.permute.xlu0 %442
  %446 = vset.pattern.permute.xlu0 0
  %447 = vperm.xlu0 %446, %v252
  %v448 = vpop.permute.xlu0 %447
  %451 = vset.pattern.permute.xlu0 0
  %452 = vperm.xlu0 %451, %v253
  %v453 = vpop.permute.xlu0 %452
  %456 = vset.pattern.permute.xlu0 0
  %457 = vperm.xlu0 %456, %v254
  %v458 = vpop.permute.xlu0 %457
  %461 = vset.pattern.permute.xlu0 0
  %462 = vperm.xlu0 %461, %v255
  %v463 = vpop.permute.xlu0 %462
  %466 = vset.pattern.permute.xlu0 0
  %467 = vperm.xlu0 %466, %v256
  %v468 = vpop.permute.xlu0 %467
  %471 = vset.pattern.permute.xlu0 0
  %472 = vperm.xlu0 %471, %v257
  %v473 = vpop.permute.xlu0 %472
  %476 = vset.pattern.permute.xlu0 0
  %477 = vperm.xlu0 %476, %v258
  %v478 = vpop.permute.xlu0 %477
  %481 = vset.pattern.permute.xlu0 0
  %482 = vperm.xlu0 %481, %v259
  %v483 = vpop.permute.xlu0 %482
  %486 = vset.pattern.permute.xlu0 0
  %487 = vperm.xlu0 %486, %v260
  %v488 = vpop.permute.xlu0 %487
  %491 = vset.pattern.permute.xlu0 0
  %492 = vperm.xlu0 %491, %v261
  %v493 = vpop.permute.xlu0 %492
  %496 = vset.pattern.permute.xlu0 0
  %497 = vperm.xlu0 %496, %v262
  %v498 = vpop.permute.xlu0 %497
  %501 = vset.pattern.permute.xlu0 0
  %502 = vperm.xlu0 %501, %v263
  %v503 = vpop.permute.xlu0 %502
  %506 = vset.pattern.permute.xlu0 0
  %507 = vperm.xlu0 %506, %v264
  %v508 = vpop.permute.xlu0 %507
  %v559 = vunpack.c.l.b16 %v163
  %v560 = vunpack.c.l.b16 %v164
  %v561 = vunpack.c.l.b16 %v165
  %v562 = vunpack.c.l.b16 %v166
  %v563 = vunpack.c.l.b16 %v167
  %v564 = vunpack.c.l.b16 %v168
  %v565 = vunpack.c.l.b16 %v169
  %v566 = vunpack.c.l.b16 %v170
  %v567 = vunpack.c.l.b16 %v171
  %v568 = vunpack.c.l.b16 %v172
  %v569 = vunpack.c.l.b16 %v173
  %v570 = vunpack.c.l.b16 %v174
  %v571 = vunpack.c.l.b16 %v175
  %v572 = vunpack.c.l.b16 %v176
  %v573 = vunpack.c.l.b16 %v177
  %v574 = vunpack.c.l.b16 %v178
  %v575 = vunpack.c.l.b16 %v179
  %v576 = vunpack.c.l.b16 %v180
  %v577 = vunpack.c.l.b16 %v181
  %v578 = vunpack.c.l.b16 %v182
  %v579 = vunpack.c.l.b16 %v183
  %v580 = vunpack.c.l.b16 %v184
  %v581 = vunpack.c.l.b16 %v185
  %v582 = vunpack.c.l.b16 %v186
  %v583 = vunpack.c.l.b16 %v187
  %v584 = vunpack.c.l.b16 %v188
  %v585 = vunpack.c.l.b16 %v189
  %v586 = vunpack.c.l.b16 %v190
  %v587 = vunpack.c.l.b16 %v191
  %v588 = vunpack.c.l.b16 %v192
  %v589 = vunpack.c.l.b16 %v193
  %v590 = vunpack.c.l.b16 %v194
  %v591 = vunpack.c.l.b16 %v195
  %v592 = vunpack.c.l.b16 %v196
  %v593 = vunpack.c.l.b16 %v197
  %v594 = vunpack.c.l.b16 %v198
  %v595 = vunpack.c.l.b16 %v199
  %v596 = vunpack.c.l.b16 %v200
  %v597 = vunpack.c.l.b16 %v201
  %v598 = vunpack.c.l.b16 %v202
  %v599 = vunpack.c.l.b16 %v203
  %v600 = vunpack.c.l.b16 %v204
  %v601 = vunpack.c.l.b16 %v205
  %v602 = vunpack.c.l.b16 %v206
  %v603 = vunpack.c.l.b16 %v207
  %v604 = vunpack.c.l.b16 %v208
  %v605 = vunpack.c.l.b16 %v209
  %v606 = vunpack.c.l.b16 %v210
  %v607 = vunpack.c.l.b16 %v211
  %v608 = vpack.c.b16 %v560, %v559
  %v609 = vpack.c.b16 %v562, %v561
  %v610 = vpack.c.b16 %v564, %v563
  %v611 = vpack.c.b16 %v566, %v565
  %v612 = vpack.c.b16 %v568, %v567
  %v613 = vpack.c.b16 %v570, %v569
  %v614 = vpack.c.b16 %v572, %v571
  %v615 = vpack.c.b16 %v574, %v573
  %v616 = vpack.c.b16 %v576, %v575
  %v617 = vpack.c.b16 %v578, %v577
  %v618 = vpack.c.b16 %v580, %v579
  %v619 = vpack.c.b16 %v582, %v581
  %v620 = vpack.c.b16 %v584, %v583
  %v621 = vpack.c.b16 %v586, %v585
  %v622 = vpack.c.b16 %v588, %v587
  %v623 = vpack.c.b16 %v590, %v589
  %v624 = vpack.c.b16 %v592, %v591
  %v625 = vpack.c.b16 %v594, %v593
  %v626 = vpack.c.b16 %v596, %v595
  %v627 = vpack.c.b16 %v598, %v597
  %v628 = vpack.c.b16 %v600, %v599
  %v629 = vpack.c.b16 %v602, %v601
  %v630 = vpack.c.b16 %v604, %v603
  %v631 = vpack.c.b16 %v606, %v605
  %v632 = vpack.c.b16 %v607, %v607
  %vm633 = vcmask 523264
  %v635 = vsel %vm633, %v608, 0
  %v638 = vsel %vm633, %v609, 0
  %v641 = vsel %vm633, %v610, 0
  %v644 = vsel %vm633, %v611, 0
  %v647 = vsel %vm633, %v612, 0
  %v650 = vsel %vm633, %v613, 0
  %v653 = vsel %vm633, %v614, 0
  %v656 = vsel %vm633, %v615, 0
  %v659 = vsel %vm633, %v616, 0
  %v662 = vsel %vm633, %v617, 0
  %v665 = vsel %vm633, %v618, 0
  %v668 = vsel %vm633, %v619, 0
  %v671 = vsel %vm633, %v620, 0
  %v674 = vsel %vm633, %v621, 0
  %v677 = vsel %vm633, %v622, 0
  %v680 = vsel %vm633, %v623, 0
  %v683 = vsel %vm633, %v624, 0
  %v686 = vsel %vm633, %v625, 0
  %v689 = vsel %vm633, %v626, 0
  %v692 = vsel %vm633, %v627, 0
  %v695 = vsel %vm633, %v628, 0
  %v698 = vsel %vm633, %v629, 0
  %v701 = vsel %vm633, %v630, 0
  %v704 = vsel %vm633, %v631, 0
  %v707 = vsel %vm633, %v632, 0
  %709 = vmatpush.bf16.msra.mxu0 0
  %710 = vmatpush.bf16.msra.mxu0 0
  %711 = vmatpush.bf16.msra.mxu0 0
  %712 = vmatpush.bf16.msra.mxu0 0
  %713 = vmatpush.bf16.msra.mxu0 %v215
  %714 = vmatpush.bf16.msra.mxu0 %v214
  %715 = vmatpush.bf16.msra.mxu0 %v213
  %716 = vmatpush.bf16.msra.mxu0 %v212
  %717 = vmatmul.bf16.gmra.mxu0 %v635
  %v718 = vpop.f32.mrf.mxu0
  %v719 = vadd.f32 %v268, %v718
  %v720 = vpop.f32.mrf.mxu0
  %v721 = vadd.f32 %v273, %v720
  %722 = vmatmul.bf16.gmra.mxu0 %v638
  %v723 = vpop.f32.mrf.mxu0
  %v724 = vadd.f32 %v278, %v723
  %v725 = vpop.f32.mrf.mxu0
  %v726 = vadd.f32 %v283, %v725
  %727 = vmatmul.bf16.gmra.mxu0 %v641
  %v728 = vpop.f32.mrf.mxu0
  %v729 = vadd.f32 %v288, %v728
  %v730 = vpop.f32.mrf.mxu0
  %v731 = vadd.f32 %v293, %v730
  %732 = vmatmul.bf16.gmra.mxu0 %v644
  %v733 = vpop.f32.mrf.mxu0
  %v734 = vadd.f32 %v298, %v733
  %v735 = vpop.f32.mrf.mxu0
  %v736 = vadd.f32 %v303, %v735
  %737 = vmatmul.bf16.gmra.mxu0 %v647
  %v738 = vpop.f32.mrf.mxu0
  %v739 = vadd.f32 %v308, %v738
  %v740 = vpop.f32.mrf.mxu0
  %v741 = vadd.f32 %v313, %v740
  %742 = vmatmul.bf16.gmra.mxu0 %v650
  %v743 = vpop.f32.mrf.mxu0
  %v744 = vadd.f32 %v318, %v743
  %v745 = vpop.f32.mrf.mxu0
  %v746 = vadd.f32 %v323, %v745
  %747 = vmatmul.bf16.gmra.mxu0 %v653
  %v748 = vpop.f32.mrf.mxu0
  %v749 = vadd.f32 %v328, %v748
  %v750 = vpop.f32.mrf.mxu0
  %v751 = vadd.f32 %v333, %v750
  %752 = vmatmul.bf16.gmra.mxu0 %v656
  %v753 = vpop.f32.mrf.mxu0
  %v754 = vadd.f32 %v338, %v753
  %v755 = vpop.f32.mrf.mxu0
  %v756 = vadd.f32 %v343, %v755
  %757 = vmatmul.bf16.gmra.mxu0 %v659
  %v758 = vpop.f32.mrf.mxu0
  %v759 = vadd.f32 %v348, %v758
  %v760 = vpop.f32.mrf.mxu0
  %v761 = vadd.f32 %v353, %v760
  %762 = vmatmul.bf16.gmra.mxu0 %v662
  %v763 = vpop.f32.mrf.mxu0
  %v764 = vadd.f32 %v358, %v763
  %v765 = vpop.f32.mrf.mxu0
  %v766 = vadd.f32 %v363, %v765
  %767 = vmatmul.bf16.gmra.mxu0 %v665
  %v768 = vpop.f32.mrf.mxu0
  %v769 = vadd.f32 %v368, %v768
  %v770 = vpop.f32.mrf.mxu0
  %v771 = vadd.f32 %v373, %v770
  %772 = vmatmul.bf16.gmra.mxu0 %v668
  %v773 = vpop.f32.mrf.mxu0
  %v774 = vadd.f32 %v378, %v773
  %v775 = vpop.f32.mrf.mxu0
  %v776 = vadd.f32 %v383, %v775
  %777 = vmatmul.bf16.gmra.mxu0 %v671
  %v778 = vpop.f32.mrf.mxu0
  %v779 = vadd.f32 %v388, %v778
  %v780 = vpop.f32.mrf.mxu0
  %v781 = vadd.f32 %v393, %v780
  %782 = vmatmul.bf16.gmra.mxu0 %v674
  %v783 = vpop.f32.mrf.mxu0
  %v784 = vadd.f32 %v398, %v783
  %v785 = vpop.f32.mrf.mxu0
  %v786 = vadd.f32 %v403, %v785
  %787 = vmatmul.bf16.gmra.mxu0 %v677
  %v788 = vpop.f32.mrf.mxu0
  %v789 = vadd.f32 %v408, %v788
  %v790 = vpop.f32.mrf.mxu0
  %v791 = vadd.f32 %v413, %v790
  %792 = vmatmul.bf16.gmra.mxu0 %v680
  %v793 = vpop.f32.mrf.mxu0
  %v794 = vadd.f32 %v418, %v793
  %v795 = vpop.f32.mrf.mxu0
  %v796 = vadd.f32 %v423, %v795
  %797 = vmatmul.bf16.gmra.mxu0 %v683
  %v798 = vpop.f32.mrf.mxu0
  %v799 = vadd.f32 %v428, %v798
  %v800 = vpop.f32.mrf.mxu0
  %v801 = vadd.f32 %v433, %v800
  %802 = vmatmul.bf16.gmra.mxu0 %v686
  %v803 = vpop.f32.mrf.mxu0
  %v804 = vadd.f32 %v438, %v803
  %v805 = vpop.f32.mrf.mxu0
  %v806 = vadd.f32 %v443, %v805
  %807 = vmatmul.bf16.gmra.mxu0 %v689
  %v808 = vpop.f32.mrf.mxu0
  %v809 = vadd.f32 %v448, %v808
  %v810 = vpop.f32.mrf.mxu0
  %v811 = vadd.f32 %v453, %v810
  %812 = vmatmul.bf16.gmra.mxu0 %v692
  %v813 = vpop.f32.mrf.mxu0
  %v814 = vadd.f32 %v458, %v813
  %v815 = vpop.f32.mrf.mxu0
  %v816 = vadd.f32 %v463, %v815
  %817 = vmatmul.bf16.gmra.mxu0 %v695
  %v818 = vpop.f32.mrf.mxu0
  %v819 = vadd.f32 %v468, %v818
  %v820 = vpop.f32.mrf.mxu0
  %v821 = vadd.f32 %v473, %v820
  %822 = vmatmul.bf16.gmra.mxu0 %v698
  %v823 = vpop.f32.mrf.mxu0
  %v824 = vadd.f32 %v478, %v823
  %v825 = vpop.f32.mrf.mxu0
  %v826 = vadd.f32 %v483, %v825
  %827 = vmatmul.bf16.gmra.mxu0 %v701
  %v828 = vpop.f32.mrf.mxu0
  %v829 = vadd.f32 %v488, %v828
  %v830 = vpop.f32.mrf.mxu0
  %v831 = vadd.f32 %v493, %v830
  %832 = vmatmul.bf16.gmra.mxu0 %v704
  %v833 = vpop.f32.mrf.mxu0
  %v834 = vadd.f32 %v498, %v833
  %v835 = vpop.f32.mrf.mxu0
  %v836 = vadd.f32 %v503, %v835
  %837 = vmatmul.bf16.gmra.mxu0 %v707
  %v838 = vpop.f32.mrf.mxu0
  %v839 = vadd.f32 %v508, %v838
  %v840 = vpop.f32.mrf.mxu0
  %841 = vdwg.mxu0
  %842 = vst [vmem:[#allocation2] sm:$0xff] %v719
  %843 = vst [vmem:[#allocation2 + $0x8] sm:$0xff] %v721
  %844 = vst [vmem:[#allocation2 + $0x10] sm:$0xff] %v724
  %845 = vst [vmem:[#allocation2 + $0x18] sm:$0xff] %v726
  %846 = vst [vmem:[#allocation2 + $0x20] sm:$0xff] %v729
  %847 = vst [vmem:[#allocation2 + $0x28] sm:$0xff] %v731
  %848 = vst [vmem:[#allocation2 + $0x30] sm:$0xff] %v734
  %849 = vst [vmem:[#allocation2 + $0x38] sm:$0xff] %v736
  %850 = vst [vmem:[#allocation2 + $0x40] sm:$0xff] %v739
  %851 = vst [vmem:[#allocation2 + $0x48] sm:$0xff] %v741
  %852 = vst [vmem:[#allocation2 + $0x50] sm:$0xff] %v744
  %853 = vst [vmem:[#allocation2 + $0x58] sm:$0xff] %v746
  %854 = vst [vmem:[#allocation2 + $0x60] sm:$0xff] %v749
  %855 = vst [vmem:[#allocation2 + $0x68] sm:$0xff] %v751
  %856 = vst [vmem:[#allocation2 + $0x70] sm:$0xff] %v754
  %857 = vst [vmem:[#allocation2 + $0x78] sm:$0xff] %v756
  %858 = vst [vmem:[#allocation2 + $0x80] sm:$0xff] %v759
  %859 = vst [vmem:[#allocation2 + $0x88] sm:$0xff] %v761
  %860 = vst [vmem:[#allocation2 + $0x90] sm:$0xff] %v764
  %861 = vst [vmem:[#allocation2 + $0x98] sm:$0xff] %v766
  %862 = vst [vmem:[#allocation2 + $0xa0] sm:$0xff] %v769
  %863 = vst [vmem:[#allocation2 + $0xa8] sm:$0xff] %v771
  %864 = vst [vmem:[#allocation2 + $0xb0] sm:$0xff] %v774
  %865 = vst [vmem:[#allocation2 + $0xb8] sm:$0xff] %v776
  %866 = vst [vmem:[#allocation2 + $0xc0] sm:$0xff] %v779
  %867 = vst [vmem:[#allocation2 + $0xc8] sm:$0xff] %v781
  %868 = vst [vmem:[#allocation2 + $0xd0] sm:$0xff] %v784
  %869 = vst [vmem:[#allocation2 + $0xd8] sm:$0xff] %v786
  %870 = vst [vmem:[#allocation2 + $0xe0] sm:$0xff] %v789
  %871 = vst [vmem:[#allocation2 + $0xe8] sm:$0xff] %v791
  %872 = vst [vmem:[#allocation2 + $0xf0] sm:$0xff] %v794
  %873 = vst [vmem:[#allocation2 + $0xf8] sm:$0xff] %v796
  %874 = vst [vmem:[#allocation2 + $0x100] sm:$0xff] %v799
  %875 = vst [vmem:[#allocation2 + $0x108] sm:$0xff] %v801
  %876 = vst [vmem:[#allocation2 + $0x110] sm:$0xff] %v804
  %877 = vst [vmem:[#allocation2 + $0x118] sm:$0xff] %v806
  %878 = vst [vmem:[#allocation2 + $0x120] sm:$0xff] %v809
  %879 = vst [vmem:[#allocation2 + $0x128] sm:$0xff] %v811
  %880 = vst [vmem:[#allocation2 + $0x130] sm:$0xff] %v814
  %881 = vst [vmem:[#allocation2 + $0x138] sm:$0xff] %v816
  %882 = vst [vmem:[#allocation2 + $0x140] sm:$0xff] %v819
  %883 = vst [vmem:[#allocation2 + $0x148] sm:$0xff] %v821
  %884 = vst [vmem:[#allocation2 + $0x150] sm:$0xff] %v824
  %885 = vst [vmem:[#allocation2 + $0x158] sm:$0xff] %v826
  %886 = vst [vmem:[#allocation2 + $0x160] sm:$0xff] %v829
  %887 = vst [vmem:[#allocation2 + $0x168] sm:$0xff] %v831
  %888 = vst [vmem:[#allocation2 + $0x170] sm:$0xff] %v834
  %889 = vst [vmem:[#allocation2 + $0x178] sm:$0xff] %v836
  %890 = vst [vmem:[#allocation2 + $0x180] sm:$0xff] %v839
  %v891 = vld [vmem:[%s1] sm:$0xff]
  %v892 = vld [vmem:[%s1 + $0x8] sm:$0xf]
  %v893 = vld [vmem:[%s2] sm:$0xff]
  %v894 = vld [vmem:[%s2 + $0x8] sm:$0xf]
  %v895 = vld [vmem:[#allocation2] sm:$0xff]
  %v896 = vld [vmem:[#allocation2 + $0x8] sm:$0xf]
  %v897 = vld [vmem:[#allocation2 + $0x30] sm:$0xff]
  %v898 = vld [vmem:[#allocation2 + $0x38] sm:$0xf]
  %v899 = vsub.f32 %v895, %v891
  %v900 = vsub.f32 %v896, %v892
  %v901 = vsub.f32 %v897, %v893
  %v902 = vsub.f32 %v898, %v894
  %v903 = vmul.f32 %v899, %v899
  %v904 = vmul.f32 %v900, %v900
  %v905 = vmul.f32 %v901, %v901
  %v906 = vmul.f32 %v902, %v902
  %v907 = vadd.f32 %v903, %v905
  %v908 = vadd.f32 %v904, %v906
  %v909 = vrsqrt.pop %v907
  %v910 = vmul.f32 %v909, %v907
  %v911 = vmul.f32 %v910, %v909
  %v912 = vmul.f32 0.5, %v911
  %v913 = vsub.f32 1.5, %v912
  %v914 = vmul.f32 %v909, %v913
  %v915 = vmul.f32 %v907, %v914
  %vm916 = vcmp.eq.f32.partialorder %v907, inf
  %v917 = vsel %vm916, %v907, %v915
  %vm918 = vcmp.eq.f32.partialorder %v907, 0.0
  %v919 = vand.u32 %v907, 2147483648
  %v920 = vsel %vm918, %v919, %v917
  %v921 = vrsqrt.pop %v908
  %v922 = vmul.f32 %v921, %v908
  %v923 = vmul.f32 %v922, %v921
  %v924 = vmul.f32 0.5, %v923
  %v925 = vsub.f32 1.5, %v924
  %v926 = vmul.f32 %v921, %v925
  %v927 = vmul.f32 %v908, %v926
  %vm928 = vcmp.eq.f32.partialorder %v908, inf
  %v929 = vsel %vm928, %v908, %v927
  %vm930 = vcmp.eq.f32.partialorder %v908, 0.0
  %v931 = vand.u32 %v908, 2147483648
  %v932 = vsel %vm930, %v931, %v929
  %vm933 = vcmask 1043456
  %v934 = vsel %vm933, %v932, 0.0
  %v935 = vadd.f32 %v920, %v934
  %v936 = vrot.slane %v935, 4
  %v937 = vadd.f32 %v935, %v936
  %v938 = vrot.slane %v937, 2
  %v939 = vadd.f32 %v937, %v938
  %v940 = vrot.slane %v939, 1
  %v941 = vadd.f32 %v939, %v940
  %v942 = vld [vmem:[#allocation2 + $0x60] sm:$0xff]
  %v943 = vld [vmem:[#allocation2 + $0x68] sm:$0xf]
  %v944 = vmax.f32 %v942, 0.0
  %v945 = vmax.f32 %v943, 0.0
  %v946 = vand.u32 2147483647, %v942
  %v947 = vand.u32 2147483647, %v943
  %v948 = vsub.f32 0.0, %v946
  %v949 = vsub.f32 0.0, %v947
  %v950 = vmul.f32 %v948, 1.442695
  %v951 = vpow.pop %v950
  %v952 = vmul.f32 %v949, 1.442695
  %v953 = vpow.pop %v952
  %v954 = vadd.f32 %v951, 1.0
  %v955 = vadd.f32 %v953, 1.0
  %v956 = vlog2.pop %v954
  %v957 = vmul.f32 %v956, 0.6931472
  %v958 = vlog2.pop %v955
  %v959 = vmul.f32 %v958, 0.6931472
  %v960 = vadd.f32 %v944, %v957
  %v961 = vadd.f32 %v945, %v959
  %v962 = vadd.f32 %v960, 0.001
  %v963 = vadd.f32 %v961, 0.001
  %v964 = vmax.f32 %v962, 1e-06
  %v965 = vmax.f32 %v963, 1e-06
  %v966 = vld [vmem:[#allocation2 + $0x90] sm:$0xff]
  %v967 = vld [vmem:[#allocation2 + $0x98] sm:$0xf]
  %v968 = vmax.f32 %v966, 0.0
  %v969 = vmax.f32 %v967, 0.0
  %v970 = vand.u32 2147483647, %v966
  %v971 = vand.u32 2147483647, %v967
  %v972 = vsub.f32 0.0, %v970
  %v973 = vsub.f32 0.0, %v971
  %v974 = vmul.f32 %v972, 1.442695
  %v975 = vpow.pop %v974
  %v976 = vmul.f32 %v973, 1.442695
  %v977 = vpow.pop %v976
  %v978 = vadd.f32 %v975, 1.0
  %v979 = vadd.f32 %v977, 1.0
  %v980 = vlog2.pop %v978
  %v981 = vmul.f32 %v980, 0.6931472
  %v982 = vlog2.pop %v979
  %v983 = vmul.f32 %v982, 0.6931472
  %v984 = vadd.f32 %v968, %v981
  %v985 = vadd.f32 %v969, %v983
  %v986 = vadd.f32 %v984, 0.001
  %v987 = vadd.f32 %v985, 0.001
  %v988 = vmax.f32 %v986, 1e-06
  %v989 = vmax.f32 %v987, 1e-06
  %v990 = vmul.f32 %v964, 4.0
  %v991 = vmul.f32 %v965, 4.0
  %v992 = vmul.f32 %v990, %v988
  %v993 = vmul.f32 %v991, %v989
  %v994 = vlog2.pop %v992
  %v995 = vmul.f32 %v994, 0.6931472
  %v996 = vlog2.pop %v993
  %v997 = vmul.f32 %v996, 0.6931472
  %v998 = vand.u32 2147483647, %v899
  %v999 = vand.u32 2147483647, %v900
  %v1000 = vrcp.pop %v964
  %v1001 = vrcp.pop %v965
  %v1002 = vmul.f32 %v964, %v1000
  %v1003 = vmul.f32 %v965, %v1001
  %v1004 = vsub.f32 2.0, %v1002
  %v1005 = vsub.f32 2.0, %v1003
  %v1006 = vmul.f32 %v1000, %v1004
  %v1007 = vmul.f32 %v1001, %v1005
  %v1008 = vmul.f32 %v998, %v1006
  %v1009 = vmul.f32 %v999, %v1007
  %v1010 = vadd.f32 %v995, %v1008
  %v1011 = vadd.f32 %v997, %v1009
  %v1012 = vand.u32 2147483647, %v901
  %v1013 = vand.u32 2147483647, %v902
  %v1014 = vrcp.pop %v988
  %v1015 = vrcp.pop %v989
  %v1016 = vmul.f32 %v988, %v1014
  %v1017 = vmul.f32 %v989, %v1015
  %v1018 = vsub.f32 2.0, %v1016
  %v1019 = vsub.f32 2.0, %v1017
  %v1020 = vmul.f32 %v1014, %v1018
  %v1021 = vmul.f32 %v1015, %v1019
  %v1022 = vmul.f32 %v1012, %v1020
  %v1023 = vmul.f32 %v1013, %v1021
  %v1024 = vadd.f32 %v1010, %v1022
  %v1025 = vadd.f32 %v1011, %v1023
  %v1026 = vsel %vm933, %v1025, 0.0
  %v1027 = vadd.f32 %v1024, %v1026
  %v1028 = vrot.slane %v1027, 4
  %v1029 = vadd.f32 %v1027, %v1028
  %v1030 = vrot.slane %v1029, 2
  %v1031 = vadd.f32 %v1029, %v1030
  %v1032 = vrot.slane %v1031, 1
  %v1033 = vadd.f32 %v1031, %v1032
  %v1034 = vld [vmem:[#allocation2 + $0xc0] sm:$0xff]
  %v1035 = vld [vmem:[#allocation2 + $0xc8] sm:$0xf]
  %v1036 = vsub.f32 %v1034, %v891
  %v1037 = vsub.f32 %v1035, %v892
  %v1038 = vld [vmem:[#allocation2 + $0xf0] sm:$0xff]
  %v1039 = vld [vmem:[#allocation2 + $0xf8] sm:$0xf]
  %v1040 = vsub.f32 %v1038, %v893
  %v1041 = vsub.f32 %v1039, %v894
  %v1042 = vmul.f32 %v1036, %v1036
  %v1043 = vmul.f32 %v1037, %v1037
  %v1044 = vmul.f32 %v1040, %v1040
  %v1045 = vmul.f32 %v1041, %v1041
  %v1046 = vadd.f32 %v1042, %v1044
  %v1047 = vadd.f32 %v1043, %v1045
  %v1048 = vrsqrt.pop %v1046
  %v1049 = vmul.f32 %v1048, %v1046
  %v1050 = vmul.f32 %v1049, %v1048
  %v1051 = vmul.f32 0.5, %v1050
  %v1052 = vsub.f32 1.5, %v1051
  %v1053 = vmul.f32 %v1048, %v1052
  %v1054 = vmul.f32 %v1046, %v1053
  %vm1055 = vcmp.eq.f32.partialorder %v1046, inf
  %v1056 = vsel %vm1055, %v1046, %v1054
  %vm1057 = vcmp.eq.f32.partialorder %v1046, 0.0
  %v1058 = vand.u32 %v1046, 2147483648
  %v1059 = vsel %vm1057, %v1058, %v1056
  %v1060 = vrsqrt.pop %v1047
  %v1061 = vmul.f32 %v1060, %v1047
  %v1062 = vmul.f32 %v1061, %v1060
  %v1063 = vmul.f32 0.5, %v1062
  %v1064 = vsub.f32 1.5, %v1063
  %v1065 = vmul.f32 %v1060, %v1064
  %v1066 = vmul.f32 %v1047, %v1065
  %vm1067 = vcmp.eq.f32.partialorder %v1047, inf
  %v1068 = vsel %vm1067, %v1047, %v1066
  %vm1069 = vcmp.eq.f32.partialorder %v1047, 0.0
  %v1070 = vand.u32 %v1047, 2147483648
  %v1071 = vsel %vm1069, %v1070, %v1068
  %v1072 = vsel %vm933, %v1071, 0.0
  %v1073 = vadd.f32 %v1059, %v1072
  %v1074 = vrot.slane %v1073, 4
  %v1075 = vadd.f32 %v1073, %v1074
  %v1076 = vrot.slane %v1075, 2
  %v1077 = vadd.f32 %v1075, %v1076
  %v1078 = vrot.slane %v1077, 1
  %v1079 = vadd.f32 %v1077, %v1078
  %v1080 = vld [vmem:[#allocation2 + $0x120] sm:$0xff]
  %v1081 = vld [vmem:[#allocation2 + $0x128] sm:$0xf]
  %v1082 = vmax.f32 %v1080, 0.0
  %v1083 = vmax.f32 %v1081, 0.0
  %v1084 = vand.u32 2147483647, %v1080
  %v1085 = vand.u32 2147483647, %v1081
  %v1086 = vsub.f32 0.0, %v1084
  %v1087 = vsub.f32 0.0, %v1085
  %v1088 = vmul.f32 %v1086, 1.442695
  %v1089 = vpow.pop %v1088
  %v1090 = vmul.f32 %v1087, 1.442695
  %v1091 = vpow.pop %v1090
  %v1092 = vadd.f32 %v1089, 1.0
  %v1093 = vadd.f32 %v1091, 1.0
  %v1094 = vlog2.pop %v1092
  %v1095 = vmul.f32 %v1094, 0.6931472
  %v1096 = vlog2.pop %v1093
  %v1097 = vmul.f32 %v1096, 0.6931472
  %v1098 = vadd.f32 %v1082, %v1095
  %v1099 = vadd.f32 %v1083, %v1097
  %v1100 = vadd.f32 %v1098, 0.001
  %v1101 = vadd.f32 %v1099, 0.001
  %v1102 = vmax.f32 %v1100, 1e-06
  %v1103 = vmax.f32 %v1101, 1e-06
  %v1104 = vld [vmem:[#allocation2 + $0x150] sm:$0xff]
  %v1105 = vld [vmem:[#allocation2 + $0x158] sm:$0xf]
  %v1106 = vmax.f32 %v1104, 0.0
  %v1107 = vmax.f32 %v1105, 0.0
  %v1108 = vand.u32 2147483647, %v1104
  %v1109 = vand.u32 2147483647, %v1105
  %v1110 = vsub.f32 0.0, %v1108
  %v1111 = vsub.f32 0.0, %v1109
  %v1112 = vmul.f32 %v1110, 1.442695
  %v1113 = vpow.pop %v1112
  %v1114 = vmul.f32 %v1111, 1.442695
  %v1115 = vpow.pop %v1114
  %v1116 = vadd.f32 %v1113, 1.0
  %v1117 = vadd.f32 %v1115, 1.0
  %v1118 = vlog2.pop %v1116
  %v1119 = vmul.f32 %v1118, 0.6931472
  %v1120 = vlog2.pop %v1117
  %v1121 = vmul.f32 %v1120, 0.6931472
  %v1122 = vadd.f32 %v1106, %v1119
  %v1123 = vadd.f32 %v1107, %v1121
  %v1124 = vadd.f32 %v1122, 0.001
  %v1125 = vadd.f32 %v1123, 0.001
  %v1126 = vmax.f32 %v1124, 1e-06
  %v1127 = vmax.f32 %v1125, 1e-06
  %v1128 = vmul.f32 %v1102, 4.0
  %v1129 = vmul.f32 %v1103, 4.0
  %v1130 = vmul.f32 %v1128, %v1126
  %v1131 = vmul.f32 %v1129, %v1127
  %v1132 = vlog2.pop %v1130
  %v1133 = vmul.f32 %v1132, 0.6931472
  %v1134 = vlog2.pop %v1131
  %v1135 = vmul.f32 %v1134, 0.6931472
  %v1136 = vand.u32 2147483647, %v1036
  %v1137 = vand.u32 2147483647, %v1037
  %v1138 = vrcp.pop %v1102
  %v1139 = vrcp.pop %v1103
  %v1140 = vmul.f32 %v1102, %v1138
  %v1141 = vmul.f32 %v1103, %v1139
  %v1142 = vsub.f32 2.0, %v1140
  %v1143 = vsub.f32 2.0, %v1141
  %v1144 = vmul.f32 %v1138, %v1142
  %v1145 = vmul.f32 %v1139, %v1143
  %v1146 = vmul.f32 %v1136, %v1144
  %v1147 = vmul.f32 %v1137, %v1145
  %v1148 = vadd.f32 %v1133, %v1146
  %v1149 = vadd.f32 %v1135, %v1147
  %v1150 = vand.u32 2147483647, %v1040
  %v1151 = vand.u32 2147483647, %v1041
  %v1152 = vrcp.pop %v1126
  %v1153 = vrcp.pop %v1127
  %v1154 = vmul.f32 %v1126, %v1152
  %v1155 = vmul.f32 %v1127, %v1153
  %v1156 = vsub.f32 2.0, %v1154
  %v1157 = vsub.f32 2.0, %v1155
  %v1158 = vmul.f32 %v1152, %v1156
  %v1159 = vmul.f32 %v1153, %v1157
  %v1160 = vmul.f32 %v1150, %v1158
  %v1161 = vmul.f32 %v1151, %v1159
  %v1162 = vadd.f32 %v1148, %v1160
  %v1163 = vadd.f32 %v1149, %v1161
  %v1164 = vsel %vm933, %v1163, 0.0
  %v1165 = vadd.f32 %v1162, %v1164
  %v1166 = vrot.slane %v1165, 4
  %v1167 = vadd.f32 %v1165, %v1166
  %v1168 = vrot.slane %v1167, 2
  %v1169 = vadd.f32 %v1167, %v1168
  %v1170 = vrot.slane %v1169, 1
  %v1171 = vadd.f32 %v1169, %v1170
  %v1172 = vld [vmem:[#allocation2 + $0x10] sm:$0xff]
  %v1173 = vld [vmem:[#allocation2 + $0x18] sm:$0xf]
  %v1174 = vld [vmem:[#allocation2 + $0x40] sm:$0xff]
  %v1175 = vld [vmem:[#allocation2 + $0x48] sm:$0xf]
  %v1176 = vsub.f32 %v1172, %v891
  %v1177 = vsub.f32 %v1173, %v892
  %v1178 = vsub.f32 %v1174, %v893
  %v1179 = vsub.f32 %v1175, %v894
  %v1180 = vmul.f32 %v1176, %v1176
  %v1181 = vmul.f32 %v1177, %v1177
  %v1182 = vmul.f32 %v1178, %v1178
  %v1183 = vmul.f32 %v1179, %v1179
  %v1184 = vadd.f32 %v1180, %v1182
  %v1185 = vadd.f32 %v1181, %v1183
  %v1186 = vrsqrt.pop %v1184
  %v1187 = vmul.f32 %v1186, %v1184
  %v1188 = vmul.f32 %v1187, %v1186
  %v1189 = vmul.f32 0.5, %v1188
  %v1190 = vsub.f32 1.5, %v1189
  %v1191 = vmul.f32 %v1186, %v1190
  %v1192 = vmul.f32 %v1184, %v1191
  %vm1193 = vcmp.eq.f32.partialorder %v1184, inf
  %v1194 = vsel %vm1193, %v1184, %v1192
  %vm1195 = vcmp.eq.f32.partialorder %v1184, 0.0
  %v1196 = vand.u32 %v1184, 2147483648
  %v1197 = vsel %vm1195, %v1196, %v1194
  %v1198 = vrsqrt.pop %v1185
  %v1199 = vmul.f32 %v1198, %v1185
  %v1200 = vmul.f32 %v1199, %v1198
  %v1201 = vmul.f32 0.5, %v1200
  %v1202 = vsub.f32 1.5, %v1201
  %v1203 = vmul.f32 %v1198, %v1202
  %v1204 = vmul.f32 %v1185, %v1203
  %vm1205 = vcmp.eq.f32.partialorder %v1185, inf
  %v1206 = vsel %vm1205, %v1185, %v1204
  %vm1207 = vcmp.eq.f32.partialorder %v1185, 0.0
  %v1208 = vand.u32 %v1185, 2147483648
  %v1209 = vsel %vm1207, %v1208, %v1206
  %v1210 = vsel %vm933, %v1209, 0.0
  %v1211 = vadd.f32 %v1197, %v1210
  %v1212 = vrot.slane %v1211, 4
  %v1213 = vadd.f32 %v1211, %v1212
  %v1214 = vrot.slane %v1213, 2
  %v1215 = vadd.f32 %v1213, %v1214
  %v1216 = vrot.slane %v1215, 1
  %v1217 = vadd.f32 %v1215, %v1216
  %v1218 = vld [vmem:[#allocation2 + $0x70] sm:$0xff]
  %v1219 = vld [vmem:[#allocation2 + $0x78] sm:$0xf]
  %v1220 = vmax.f32 %v1218, 0.0
  %v1221 = vmax.f32 %v1219, 0.0
  %v1222 = vand.u32 2147483647, %v1218
  %v1223 = vand.u32 2147483647, %v1219
  %v1224 = vsub.f32 0.0, %v1222
  %v1225 = vsub.f32 0.0, %v1223
  %v1226 = vmul.f32 %v1224, 1.442695
  %v1227 = vpow.pop %v1226
  %v1228 = vmul.f32 %v1225, 1.442695
  %v1229 = vpow.pop %v1228
  %v1230 = vadd.f32 %v1227, 1.0
  %v1231 = vadd.f32 %v1229, 1.0
  %v1232 = vlog2.pop %v1230
  %v1233 = vmul.f32 %v1232, 0.6931472
  %v1234 = vlog2.pop %v1231
  %v1235 = vmul.f32 %v1234, 0.6931472
  %v1236 = vadd.f32 %v1220, %v1233
  %v1237 = vadd.f32 %v1221, %v1235
  %v1238 = vadd.f32 %v1236, 0.001
  %v1239 = vadd.f32 %v1237, 0.001
  %v1240 = vmax.f32 %v1238, 1e-06
  %v1241 = vmax.f32 %v1239, 1e-06
  %v1242 = vld [vmem:[#allocation2 + $0xa0] sm:$0xff]
  %v1243 = vld [vmem:[#allocation2 + $0xa8] sm:$0xf]
  %v1244 = vmax.f32 %v1242, 0.0
  %v1245 = vmax.f32 %v1243, 0.0
  %v1246 = vand.u32 2147483647, %v1242
  %v1247 = vand.u32 2147483647, %v1243
  %v1248 = vsub.f32 0.0, %v1246
  %v1249 = vsub.f32 0.0, %v1247
  %v1250 = vmul.f32 %v1248, 1.442695
  %v1251 = vpow.pop %v1250
  %v1252 = vmul.f32 %v1249, 1.442695
  %v1253 = vpow.pop %v1252
  %v1254 = vadd.f32 %v1251, 1.0
  %v1255 = vadd.f32 %v1253, 1.0
  %v1256 = vlog2.pop %v1254
  %v1257 = vmul.f32 %v1256, 0.6931472
  %v1258 = vlog2.pop %v1255
  %v1259 = vmul.f32 %v1258, 0.6931472
  %v1260 = vadd.f32 %v1244, %v1257
  %v1261 = vadd.f32 %v1245, %v1259
  %v1262 = vadd.f32 %v1260, 0.001
  %v1263 = vadd.f32 %v1261, 0.001
  %v1264 = vmax.f32 %v1262, 1e-06
  %v1265 = vmax.f32 %v1263, 1e-06
  %v1266 = vmul.f32 %v1240, 4.0
  %v1267 = vmul.f32 %v1241, 4.0
  %v1268 = vmul.f32 %v1266, %v1264
  %v1269 = vmul.f32 %v1267, %v1265
  %v1270 = vlog2.pop %v1268
  %v1271 = vmul.f32 %v1270, 0.6931472
  %v1272 = vlog2.pop %v1269
  %v1273 = vmul.f32 %v1272, 0.6931472
  %v1274 = vand.u32 2147483647, %v1176
  %v1275 = vand.u32 2147483647, %v1177
  %v1276 = vrcp.pop %v1240
  %v1277 = vrcp.pop %v1241
  %v1278 = vmul.f32 %v1240, %v1276
  %v1279 = vmul.f32 %v1241, %v1277
  %v1280 = vsub.f32 2.0, %v1278
  %v1281 = vsub.f32 2.0, %v1279
  %v1282 = vmul.f32 %v1276, %v1280
  %v1283 = vmul.f32 %v1277, %v1281
  %v1284 = vmul.f32 %v1274, %v1282
  %v1285 = vmul.f32 %v1275, %v1283
  %v1286 = vadd.f32 %v1271, %v1284
  %v1287 = vadd.f32 %v1273, %v1285
  %v1288 = vand.u32 2147483647, %v1178
  %v1289 = vand.u32 2147483647, %v1179
  %v1290 = vrcp.pop %v1264
  %v1291 = vrcp.pop %v1265
  %v1292 = vmul.f32 %v1264, %v1290
  %v1293 = vmul.f32 %v1265, %v1291
  %v1294 = vsub.f32 2.0, %v1292
  %v1295 = vsub.f32 2.0, %v1293
  %v1296 = vmul.f32 %v1290, %v1294
  %v1297 = vmul.f32 %v1291, %v1295
  %v1298 = vmul.f32 %v1288, %v1296
  %v1299 = vmul.f32 %v1289, %v1297
  %v1300 = vadd.f32 %v1286, %v1298
  %v1301 = vadd.f32 %v1287, %v1299
  %v1302 = vsel %vm933, %v1301, 0.0
  %v1303 = vadd.f32 %v1300, %v1302
  %v1304 = vrot.slane %v1303, 4
  %v1305 = vadd.f32 %v1303, %v1304
  %v1306 = vrot.slane %v1305, 2
  %v1307 = vadd.f32 %v1305, %v1306
  %v1308 = vrot.slane %v1307, 1
  %v1309 = vadd.f32 %v1307, %v1308
  %v1310 = vld [vmem:[#allocation2 + $0xd0] sm:$0xff]
  %v1311 = vld [vmem:[#allocation2 + $0xd8] sm:$0xf]
  %v1312 = vsub.f32 %v1310, %v891
  %v1313 = vsub.f32 %v1311, %v892
  %v1314 = vld [vmem:[#allocation2 + $0x100] sm:$0xff]
  %v1315 = vld [vmem:[#allocation2 + $0x108] sm:$0xf]
  %v1316 = vsub.f32 %v1314, %v893
  %v1317 = vsub.f32 %v1315, %v894
  %v1318 = vmul.f32 %v1312, %v1312
  %v1319 = vmul.f32 %v1313, %v1313
  %v1320 = vmul.f32 %v1316, %v1316
  %v1321 = vmul.f32 %v1317, %v1317
  %v1322 = vadd.f32 %v1318, %v1320
  %v1323 = vadd.f32 %v1319, %v1321
  %v1324 = vrsqrt.pop %v1322
  %v1325 = vmul.f32 %v1324, %v1322
  %v1326 = vmul.f32 %v1325, %v1324
  %v1327 = vmul.f32 0.5, %v1326
  %v1328 = vsub.f32 1.5, %v1327
  %v1329 = vmul.f32 %v1324, %v1328
  %v1330 = vmul.f32 %v1322, %v1329
  %vm1331 = vcmp.eq.f32.partialorder %v1322, inf
  %v1332 = vsel %vm1331, %v1322, %v1330
  %vm1333 = vcmp.eq.f32.partialorder %v1322, 0.0
  %v1334 = vand.u32 %v1322, 2147483648
  %v1335 = vsel %vm1333, %v1334, %v1332
  %v1336 = vrsqrt.pop %v1323
  %v1337 = vmul.f32 %v1336, %v1323
  %v1338 = vmul.f32 %v1337, %v1336
  %v1339 = vmul.f32 0.5, %v1338
  %v1340 = vsub.f32 1.5, %v1339
  %v1341 = vmul.f32 %v1336, %v1340
  %v1342 = vmul.f32 %v1323, %v1341
  %vm1343 = vcmp.eq.f32.partialorder %v1323, inf
  %v1344 = vsel %vm1343, %v1323, %v1342
  %vm1345 = vcmp.eq.f32.partialorder %v1323, 0.0
  %v1346 = vand.u32 %v1323, 2147483648
  %v1347 = vsel %vm1345, %v1346, %v1344
  %v1348 = vsel %vm933, %v1347, 0.0
  %v1349 = vadd.f32 %v1335, %v1348
  %v1350 = vrot.slane %v1349, 4
  %v1351 = vadd.f32 %v1349, %v1350
  %v1352 = vrot.slane %v1351, 2
  %v1353 = vadd.f32 %v1351, %v1352
  %v1354 = vrot.slane %v1353, 1
  %v1355 = vadd.f32 %v1353, %v1354
  %v1356 = vld [vmem:[#allocation2 + $0x130] sm:$0xff]
  %v1357 = vld [vmem:[#allocation2 + $0x138] sm:$0xf]
  %v1358 = vmax.f32 %v1356, 0.0
  %v1359 = vmax.f32 %v1357, 0.0
  %v1360 = vand.u32 2147483647, %v1356
  %v1361 = vand.u32 2147483647, %v1357
  %v1362 = vsub.f32 0.0, %v1360
  %v1363 = vsub.f32 0.0, %v1361
  %v1364 = vmul.f32 %v1362, 1.442695
  %v1365 = vpow.pop %v1364
  %v1366 = vmul.f32 %v1363, 1.442695
  %v1367 = vpow.pop %v1366
  %v1368 = vadd.f32 %v1365, 1.0
  %v1369 = vadd.f32 %v1367, 1.0
  %v1370 = vlog2.pop %v1368
  %v1371 = vmul.f32 %v1370, 0.6931472
  %v1372 = vlog2.pop %v1369
  %v1373 = vmul.f32 %v1372, 0.6931472
  %v1374 = vadd.f32 %v1358, %v1371
  %v1375 = vadd.f32 %v1359, %v1373
  %v1376 = vadd.f32 %v1374, 0.001
  %v1377 = vadd.f32 %v1375, 0.001
  %v1378 = vmax.f32 %v1376, 1e-06
  %v1379 = vmax.f32 %v1377, 1e-06
  %v1380 = vld [vmem:[#allocation2 + $0x160] sm:$0xff]
  %v1381 = vld [vmem:[#allocation2 + $0x168] sm:$0xf]
  %v1382 = vmax.f32 %v1380, 0.0
  %v1383 = vmax.f32 %v1381, 0.0
  %v1384 = vand.u32 2147483647, %v1380
  %v1385 = vand.u32 2147483647, %v1381
  %v1386 = vsub.f32 0.0, %v1384
  %v1387 = vsub.f32 0.0, %v1385
  %v1388 = vmul.f32 %v1386, 1.442695
  %v1389 = vpow.pop %v1388
  %v1390 = vmul.f32 %v1387, 1.442695
  %v1391 = vpow.pop %v1390
  %v1392 = vadd.f32 %v1389, 1.0
  %v1393 = vadd.f32 %v1391, 1.0
  %v1394 = vlog2.pop %v1392
  %v1395 = vmul.f32 %v1394, 0.6931472
  %v1396 = vlog2.pop %v1393
  %v1397 = vmul.f32 %v1396, 0.6931472
  %v1398 = vadd.f32 %v1382, %v1395
  %v1399 = vadd.f32 %v1383, %v1397
  %v1400 = vadd.f32 %v1398, 0.001
  %v1401 = vadd.f32 %v1399, 0.001
  %v1402 = vmax.f32 %v1400, 1e-06
  %v1403 = vmax.f32 %v1401, 1e-06
  %v1404 = vmul.f32 %v1378, 4.0
  %v1405 = vmul.f32 %v1379, 4.0
  %v1406 = vmul.f32 %v1404, %v1402
  %v1407 = vmul.f32 %v1405, %v1403
  %v1408 = vlog2.pop %v1406
  %v1409 = vmul.f32 %v1408, 0.6931472
  %v1410 = vlog2.pop %v1407
  %v1411 = vmul.f32 %v1410, 0.6931472
  %v1412 = vand.u32 2147483647, %v1312
  %v1413 = vand.u32 2147483647, %v1313
  %v1414 = vrcp.pop %v1378
  %v1415 = vrcp.pop %v1379
  %v1416 = vmul.f32 %v1378, %v1414
  %v1417 = vmul.f32 %v1379, %v1415
  %v1418 = vsub.f32 2.0, %v1416
  %v1419 = vsub.f32 2.0, %v1417
  %v1420 = vmul.f32 %v1414, %v1418
  %v1421 = vmul.f32 %v1415, %v1419
  %v1422 = vmul.f32 %v1412, %v1420
  %v1423 = vmul.f32 %v1413, %v1421
  %v1424 = vadd.f32 %v1409, %v1422
  %v1425 = vadd.f32 %v1411, %v1423
  %v1426 = vand.u32 2147483647, %v1316
  %v1427 = vand.u32 2147483647, %v1317
  %v1428 = vrcp.pop %v1402
  %v1429 = vrcp.pop %v1403
  %v1430 = vmul.f32 %v1402, %v1428
  %v1431 = vmul.f32 %v1403, %v1429
  %v1432 = vsub.f32 2.0, %v1430
  %v1433 = vsub.f32 2.0, %v1431
  %v1434 = vmul.f32 %v1428, %v1432
  %v1435 = vmul.f32 %v1429, %v1433
  %v1436 = vmul.f32 %v1426, %v1434
  %v1437 = vmul.f32 %v1427, %v1435
  %v1438 = vadd.f32 %v1424, %v1436
  %v1439 = vadd.f32 %v1425, %v1437
  %v1440 = vsel %vm933, %v1439, 0.0
  %v1441 = vadd.f32 %v1438, %v1440
  %v1442 = vrot.slane %v1441, 4
  %v1443 = vadd.f32 %v1441, %v1442
  %v1444 = vrot.slane %v1443, 2
  %v1445 = vadd.f32 %v1443, %v1444
  %v1446 = vrot.slane %v1445, 1
  %v1447 = vadd.f32 %v1445, %v1446
  %v1448 = vld [vmem:[#allocation2 + $0x20] sm:$0xff]
  %v1449 = vld [vmem:[#allocation2 + $0x28] sm:$0xf]
  %v1450 = vld [vmem:[#allocation2 + $0x50] sm:$0xff]
  %v1451 = vld [vmem:[#allocation2 + $0x58] sm:$0xf]
  %v1452 = vsub.f32 %v1448, %v891
  %v1453 = vsub.f32 %v1449, %v892
  %v1454 = vsub.f32 %v1450, %v893
  %v1455 = vsub.f32 %v1451, %v894
  %v1456 = vmul.f32 %v1452, %v1452
  %v1457 = vmul.f32 %v1453, %v1453
  %v1458 = vmul.f32 %v1454, %v1454
  %v1459 = vmul.f32 %v1455, %v1455
  %v1460 = vadd.f32 %v1456, %v1458
  %v1461 = vadd.f32 %v1457, %v1459
  %v1462 = vrsqrt.pop %v1460
  %v1463 = vmul.f32 %v1462, %v1460
  %v1464 = vmul.f32 %v1463, %v1462
  %v1465 = vmul.f32 0.5, %v1464
  %v1466 = vsub.f32 1.5, %v1465
  %v1467 = vmul.f32 %v1462, %v1466
  %v1468 = vmul.f32 %v1460, %v1467
  %vm1469 = vcmp.eq.f32.partialorder %v1460, inf
  %v1470 = vsel %vm1469, %v1460, %v1468
  %vm1471 = vcmp.eq.f32.partialorder %v1460, 0.0
  %v1472 = vand.u32 %v1460, 2147483648
  %v1473 = vsel %vm1471, %v1472, %v1470
  %v1474 = vrsqrt.pop %v1461
  %v1475 = vmul.f32 %v1474, %v1461
  %v1476 = vmul.f32 %v1475, %v1474
  %v1477 = vmul.f32 0.5, %v1476
  %v1478 = vsub.f32 1.5, %v1477
  %v1479 = vmul.f32 %v1474, %v1478
  %v1480 = vmul.f32 %v1461, %v1479
  %vm1481 = vcmp.eq.f32.partialorder %v1461, inf
  %v1482 = vsel %vm1481, %v1461, %v1480
  %vm1483 = vcmp.eq.f32.partialorder %v1461, 0.0
  %v1484 = vand.u32 %v1461, 2147483648
  %v1485 = vsel %vm1483, %v1484, %v1482
  %v1486 = vsel %vm933, %v1485, 0.0
  %v1487 = vadd.f32 %v1473, %v1486
  %v1488 = vrot.slane %v1487, 4
  %v1489 = vadd.f32 %v1487, %v1488
  %v1490 = vrot.slane %v1489, 2
  %v1491 = vadd.f32 %v1489, %v1490
  %v1492 = vrot.slane %v1491, 1
  %v1493 = vadd.f32 %v1491, %v1492
  %v1494 = vld [vmem:[#allocation2 + $0x80] sm:$0xff]
  %v1495 = vld [vmem:[#allocation2 + $0x88] sm:$0xf]
  %v1496 = vmax.f32 %v1494, 0.0
  %v1497 = vmax.f32 %v1495, 0.0
  %v1498 = vand.u32 2147483647, %v1494
  %v1499 = vand.u32 2147483647, %v1495
  %v1500 = vsub.f32 0.0, %v1498
  %v1501 = vsub.f32 0.0, %v1499
  %v1502 = vmul.f32 %v1500, 1.442695
  %v1503 = vpow.pop %v1502
  %v1504 = vmul.f32 %v1501, 1.442695
  %v1505 = vpow.pop %v1504
  %v1506 = vadd.f32 %v1503, 1.0
  %v1507 = vadd.f32 %v1505, 1.0
  %v1508 = vlog2.pop %v1506
  %v1509 = vmul.f32 %v1508, 0.6931472
  %v1510 = vlog2.pop %v1507
  %v1511 = vmul.f32 %v1510, 0.6931472
  %v1512 = vadd.f32 %v1496, %v1509
  %v1513 = vadd.f32 %v1497, %v1511
  %v1514 = vadd.f32 %v1512, 0.001
  %v1515 = vadd.f32 %v1513, 0.001
  %v1516 = vmax.f32 %v1514, 1e-06
  %v1517 = vmax.f32 %v1515, 1e-06
  %v1518 = vld [vmem:[#allocation2 + $0xb0] sm:$0xff]
  %v1519 = vld [vmem:[#allocation2 + $0xb8] sm:$0xf]
  %v1520 = vmax.f32 %v1518, 0.0
  %v1521 = vmax.f32 %v1519, 0.0
  %v1522 = vand.u32 2147483647, %v1518
  %v1523 = vand.u32 2147483647, %v1519
  %v1524 = vsub.f32 0.0, %v1522
  %v1525 = vsub.f32 0.0, %v1523
  %v1526 = vmul.f32 %v1524, 1.442695
  %v1527 = vpow.pop %v1526
  %v1528 = vmul.f32 %v1525, 1.442695
  %v1529 = vpow.pop %v1528
  %v1530 = vadd.f32 %v1527, 1.0
  %v1531 = vadd.f32 %v1529, 1.0
  %v1532 = vlog2.pop %v1530
  %v1533 = vmul.f32 %v1532, 0.6931472
  %v1534 = vlog2.pop %v1531
  %v1535 = vmul.f32 %v1534, 0.6931472
  %v1536 = vadd.f32 %v1520, %v1533
  %v1537 = vadd.f32 %v1521, %v1535
  %v1538 = vadd.f32 %v1536, 0.001
  %v1539 = vadd.f32 %v1537, 0.001
  %v1540 = vmax.f32 %v1538, 1e-06
  %v1541 = vmax.f32 %v1539, 1e-06
  %v1542 = vmul.f32 %v1516, 4.0
  %v1543 = vmul.f32 %v1517, 4.0
  %v1544 = vmul.f32 %v1542, %v1540
  %v1545 = vmul.f32 %v1543, %v1541
  %v1546 = vlog2.pop %v1544
  %v1547 = vmul.f32 %v1546, 0.6931472
  %v1548 = vlog2.pop %v1545
  %v1549 = vmul.f32 %v1548, 0.6931472
  %v1550 = vand.u32 2147483647, %v1452
  %v1551 = vand.u32 2147483647, %v1453
  %v1552 = vrcp.pop %v1516
  %v1553 = vrcp.pop %v1517
  %v1554 = vmul.f32 %v1516, %v1552
  %v1555 = vmul.f32 %v1517, %v1553
  %v1556 = vsub.f32 2.0, %v1554
  %v1557 = vsub.f32 2.0, %v1555
  %v1558 = vmul.f32 %v1552, %v1556
  %v1559 = vmul.f32 %v1553, %v1557
  %v1560 = vmul.f32 %v1550, %v1558
  %v1561 = vmul.f32 %v1551, %v1559
  %v1562 = vadd.f32 %v1547, %v1560
  %v1563 = vadd.f32 %v1549, %v1561
  %v1564 = vand.u32 2147483647, %v1454
  %v1565 = vand.u32 2147483647, %v1455
  %v1566 = vrcp.pop %v1540
  %v1567 = vrcp.pop %v1541
  %v1568 = vmul.f32 %v1540, %v1566
  %v1569 = vmul.f32 %v1541, %v1567
  %v1570 = vsub.f32 2.0, %v1568
  %v1571 = vsub.f32 2.0, %v1569
  %v1572 = vmul.f32 %v1566, %v1570
  %v1573 = vmul.f32 %v1567, %v1571
  %v1574 = vmul.f32 %v1564, %v1572
  %v1575 = vmul.f32 %v1565, %v1573
  %v1576 = vadd.f32 %v1562, %v1574
  %v1577 = vadd.f32 %v1563, %v1575
  %v1578 = vsel %vm933, %v1577, 0.0
  %v1579 = vadd.f32 %v1576, %v1578
  %v1580 = vrot.slane %v1579, 4
  %v1581 = vadd.f32 %v1579, %v1580
  %v1582 = vrot.slane %v1581, 2
  %v1583 = vadd.f32 %v1581, %v1582
  %v1584 = vrot.slane %v1583, 1
  %v1585 = vadd.f32 %v1583, %v1584
  %v1586 = vld [vmem:[#allocation2 + $0xe0] sm:$0xff]
  %v1587 = vld [vmem:[#allocation2 + $0xe8] sm:$0xf]
  %v1588 = vsub.f32 %v1586, %v891
  %v1589 = vsub.f32 %v1587, %v892
  %v1590 = vld [vmem:[#allocation2 + $0x110] sm:$0xff]
  %v1591 = vld [vmem:[#allocation2 + $0x118] sm:$0xf]
  %v1592 = vsub.f32 %v1590, %v893
  %v1593 = vsub.f32 %v1591, %v894
  %v1594 = vmul.f32 %v1588, %v1588
  %v1595 = vmul.f32 %v1589, %v1589
  %v1596 = vmul.f32 %v1592, %v1592
  %v1597 = vmul.f32 %v1593, %v1593
  %v1598 = vadd.f32 %v1594, %v1596
  %v1599 = vadd.f32 %v1595, %v1597
  %v1600 = vrsqrt.pop %v1598
  %v1601 = vmul.f32 %v1600, %v1598
  %v1602 = vmul.f32 %v1601, %v1600
  %v1603 = vmul.f32 0.5, %v1602
  %v1604 = vsub.f32 1.5, %v1603
  %v1605 = vmul.f32 %v1600, %v1604
  %v1606 = vmul.f32 %v1598, %v1605
  %vm1607 = vcmp.eq.f32.partialorder %v1598, inf
  %v1608 = vsel %vm1607, %v1598, %v1606
  %vm1609 = vcmp.eq.f32.partialorder %v1598, 0.0
  %v1610 = vand.u32 %v1598, 2147483648
  %v1611 = vsel %vm1609, %v1610, %v1608
  %v1612 = vrsqrt.pop %v1599
  %v1613 = vmul.f32 %v1612, %v1599
  %v1614 = vmul.f32 %v1613, %v1612
  %v1615 = vmul.f32 0.5, %v1614
  %v1616 = vsub.f32 1.5, %v1615
  %v1617 = vmul.f32 %v1612, %v1616
  %v1618 = vmul.f32 %v1599, %v1617
  %vm1619 = vcmp.eq.f32.partialorder %v1599, inf
  %v1620 = vsel %vm1619, %v1599, %v1618
  %vm1621 = vcmp.eq.f32.partialorder %v1599, 0.0
  %v1622 = vand.u32 %v1599, 2147483648
  %v1623 = vsel %vm1621, %v1622, %v1620
  %v1624 = vsel %vm933, %v1623, 0.0
  %v1625 = vadd.f32 %v1611, %v1624
  %v1626 = vrot.slane %v1625, 4
  %v1627 = vadd.f32 %v1625, %v1626
  %v1628 = vrot.slane %v1627, 2
  %v1629 = vadd.f32 %v1627, %v1628
  %v1630 = vrot.slane %v1629, 1
  %v1631 = vadd.f32 %v1629, %v1630
  %v1632 = vld [vmem:[#allocation2 + $0x140] sm:$0xff]
  %v1633 = vld [vmem:[#allocation2 + $0x148] sm:$0xf]
  %v1634 = vmax.f32 %v1632, 0.0
  %v1635 = vmax.f32 %v1633, 0.0
  %v1636 = vand.u32 2147483647, %v1632
  %v1637 = vand.u32 2147483647, %v1633
  %v1638 = vsub.f32 0.0, %v1636
  %v1639 = vsub.f32 0.0, %v1637
  %v1640 = vmul.f32 %v1638, 1.442695
  %v1641 = vpow.pop %v1640
  %v1642 = vmul.f32 %v1639, 1.442695
  %v1643 = vpow.pop %v1642
  %v1644 = vadd.f32 %v1641, 1.0
  %v1645 = vadd.f32 %v1643, 1.0
  %v1646 = vlog2.pop %v1644
  %v1647 = vmul.f32 %v1646, 0.6931472
  %v1648 = vlog2.pop %v1645
  %v1649 = vmul.f32 %v1648, 0.6931472
  %v1650 = vadd.f32 %v1634, %v1647
  %v1651 = vadd.f32 %v1635, %v1649
  %v1652 = vadd.f32 %v1650, 0.001
  %v1653 = vadd.f32 %v1651, 0.001
  %v1654 = vmax.f32 %v1652, 1e-06
  %v1655 = vmax.f32 %v1653, 1e-06
  %v1656 = vld [vmem:[#allocation2 + $0x170] sm:$0xff]
  %v1657 = vld [vmem:[#allocation2 + $0x178] sm:$0xf]
  %v1658 = vmax.f32 %v1656, 0.0
  %v1659 = vmax.f32 %v1657, 0.0
  %v1660 = vand.u32 2147483647, %v1656
  %v1661 = vand.u32 2147483647, %v1657
  %v1662 = vsub.f32 0.0, %v1660
  %v1663 = vsub.f32 0.0, %v1661
  %v1664 = vmul.f32 %v1662, 1.442695
  %v1665 = vpow.pop %v1664
  %v1666 = vmul.f32 %v1663, 1.442695
  %v1667 = vpow.pop %v1666
  %v1668 = vadd.f32 %v1665, 1.0
  %v1669 = vadd.f32 %v1667, 1.0
  %v1670 = vlog2.pop %v1668
  %v1671 = vmul.f32 %v1670, 0.6931472
  %v1672 = vlog2.pop %v1669
  %v1673 = vmul.f32 %v1672, 0.6931472
  %v1674 = vadd.f32 %v1658, %v1671
  %v1675 = vadd.f32 %v1659, %v1673
  %v1676 = vadd.f32 %v1674, 0.001
  %v1677 = vadd.f32 %v1675, 0.001
  %v1678 = vmax.f32 %v1676, 1e-06
  %v1679 = vmax.f32 %v1677, 1e-06
  %v1680 = vmul.f32 %v1654, 4.0
  %v1681 = vmul.f32 %v1655, 4.0
  %v1682 = vmul.f32 %v1680, %v1678
  %v1683 = vmul.f32 %v1681, %v1679
  %v1684 = vlog2.pop %v1682
  %v1685 = vmul.f32 %v1684, 0.6931472
  %v1686 = vlog2.pop %v1683
  %v1687 = vmul.f32 %v1686, 0.6931472
  %v1688 = vand.u32 2147483647, %v1588
  %v1689 = vand.u32 2147483647, %v1589
  %v1690 = vrcp.pop %v1654
  %v1691 = vrcp.pop %v1655
  %v1692 = vmul.f32 %v1654, %v1690
  %v1693 = vmul.f32 %v1655, %v1691
  %v1694 = vsub.f32 2.0, %v1692
  %v1695 = vsub.f32 2.0, %v1693
  %v1696 = vmul.f32 %v1690, %v1694
  %v1697 = vmul.f32 %v1691, %v1695
  %v1698 = vmul.f32 %v1688, %v1696
  %v1699 = vmul.f32 %v1689, %v1697
  %v1700 = vadd.f32 %v1685, %v1698
  %v1701 = vadd.f32 %v1687, %v1699
  %v1702 = vand.u32 2147483647, %v1592
  %v1703 = vand.u32 2147483647, %v1593
  %v1704 = vrcp.pop %v1678
  %v1705 = vrcp.pop %v1679
  %v1706 = vmul.f32 %v1678, %v1704
  %v1707 = vmul.f32 %v1679, %v1705
  %v1708 = vsub.f32 2.0, %v1706
  %v1709 = vsub.f32 2.0, %v1707
  %v1710 = vmul.f32 %v1704, %v1708
  %v1711 = vmul.f32 %v1705, %v1709
  %v1712 = vmul.f32 %v1702, %v1710
  %v1713 = vmul.f32 %v1703, %v1711
  %v1714 = vadd.f32 %v1700, %v1712
  %v1715 = vadd.f32 %v1701, %v1713
  %v1716 = vsel %vm933, %v1715, 0.0
  %v1717 = vadd.f32 %v1714, %v1716
  %v1718 = vrot.slane %v1717, 4
  %v1719 = vadd.f32 %v1717, %v1718
  %v1720 = vrot.slane %v1719, 2
  %v1721 = vadd.f32 %v1719, %v1720
  %v1722 = vrot.slane %v1721, 1
  %v1723 = vadd.f32 %v1721, %v1722
  %vm1724 = vcmask 1040384
  %v1725 = vsel %vm1724, %v941, %v1217
  %vm1726 = vcmask 1041408
  %v1727 = vsel %vm1726, %v1725, %v1493
  %v1729 = vrot.slane %v932, 3
  %v1732 = vrot.slane %v1209, 2
  %v1735 = vrot.slane %v1485, 1
  %v1737 = vsel %vm1724, %v1729, %v1732
  %v1738 = vsel %vm1726, %v1737, %v1735
  %v1739 = vsel %vm1724, %v1033, %v1309
  %v1740 = vsel %vm1726, %v1739, %v1585
  %v1741 = vsel %vm1724, %v1079, %v1355
  %v1742 = vsel %vm1726, %v1741, %v1631
  %v1743 = vsel %vm1724, %v1171, %v1447
  %v1744 = vsel %vm1726, %v1743, %v1723
  %v1745 = vlaneseq
  %v1746 = vshrl.u32 %v1745, 7
  %vm1747 = vcmp.eq.f32.partialorder %v1727, %v1727
  %v1748 = vsel %vm1747, %v1727, inf
  %vm1749 = vcmask 1042432
  %v1750 = vsel %vm1749, %v1748, inf
  %v1751 = vrot.slane %v1750, 4
  %v1752 = vmin.f32 %v1750, %v1751
  %v1753 = vrot.slane %v1752, 2
  %v1754 = vmin.f32 %v1752, %v1753
  %v1755 = vrot.slane %v1754, 1
  %v1756 = vmin.f32 %v1754, %v1755
  %vm1757 = vcmp.le.f32.partialorder %v1748, %v1756
  %v1758 = vsel %vm1757, %v1746, 3
  %v1759 = vsel %vm1749, %v1758, 2147483647
  %v1760 = vrot.slane %v1759, 4
  %vm1761 = vcmp.lt.s32.totalorder %v1759, %v1760
  %v1762 = vsel %vm1761, %v1759, %v1760
  %v1763 = vrot.slane %v1762, 2
  %vm1764 = vcmp.lt.s32.totalorder %v1762, %v1763
  %v1765 = vsel %vm1764, %v1762, %v1763
  %v1766 = vrot.slane %v1765, 1
  %vm1767 = vcmp.lt.s32.totalorder %v1765, %v1766
  %v1768 = vsel %vm1767, %v1765, %v1766
  %vm1769 = vcmp.eq.s32.totalorder %v1746, %v1768
  %v1770 = vsel %vm1769, 1, 0
  %v1771 = vcvt.s32.f32 %v1770
  %vm1772 = vcmp.eq.f32.partialorder %v1738, %v1738
  %v1773 = vsel %vm1772, %v1738, inf
  %v1774 = vsel %vm1749, %v1773, inf
  %v1775 = vrot.slane %v1774, 4
  %v1776 = vmin.f32 %v1774, %v1775
  %v1777 = vrot.slane %v1776, 2
  %v1778 = vmin.f32 %v1776, %v1777
  %v1779 = vrot.slane %v1778, 1
  %v1780 = vmin.f32 %v1778, %v1779
  %vm1781 = vcmp.le.f32.partialorder %v1773, %v1780
  %v1782 = vsel %vm1781, %v1746, 3
  %v1783 = vsel %vm1749, %v1782, 2147483647
  %v1784 = vrot.slane %v1783, 4
  %vm1785 = vcmp.lt.s32.totalorder %v1783, %v1784
  %v1786 = vsel %vm1785, %v1783, %v1784
  %v1787 = vrot.slane %v1786, 2
  %vm1788 = vcmp.lt.s32.totalorder %v1786, %v1787
  %v1789 = vsel %vm1788, %v1786, %v1787
  %v1790 = vrot.slane %v1789, 1
  %vm1791 = vcmp.lt.s32.totalorder %v1789, %v1790
  %v1792 = vsel %vm1791, %v1789, %v1790
  %vm1793 = vcmp.eq.s32.totalorder %v1746, %v1792
  %v1794 = vsel %vm1793, 1, 0
  %v1795 = vcvt.s32.f32 %v1794
  %vm1796 = vcmp.eq.f32.partialorder %v1742, %v1742
  %v1797 = vsel %vm1796, %v1742, inf
  %v1798 = vsel %vm1749, %v1797, inf
  %v1799 = vrot.slane %v1798, 4
  %v1800 = vmin.f32 %v1798, %v1799
  %v1801 = vrot.slane %v1800, 2
  %v1802 = vmin.f32 %v1800, %v1801
  %v1803 = vrot.slane %v1802, 1
  %v1804 = vmin.f32 %v1802, %v1803
  %vm1805 = vcmp.le.f32.partialorder %v1797, %v1804
  %v1806 = vsel %vm1805, %v1746, 3
  %v1807 = vsel %vm1749, %v1806, 2147483647
  %v1808 = vrot.slane %v1807, 4
  %vm1809 = vcmp.lt.s32.totalorder %v1807, %v1808
  %v1810 = vsel %vm1809, %v1807, %v1808
  %v1811 = vrot.slane %v1810, 2
  %vm1812 = vcmp.lt.s32.totalorder %v1810, %v1811
  %v1813 = vsel %vm1812, %v1810, %v1811
  %v1814 = vrot.slane %v1813, 1
  %vm1815 = vcmp.lt.s32.totalorder %v1813, %v1814
  %v1816 = vsel %vm1815, %v1813, %v1814
  %vm1817 = vcmp.eq.s32.totalorder %v1746, %v1816
  %v1818 = vsel %vm1817, 1, 0
  %v1819 = vcvt.s32.f32 %v1818
  %v1820 = vlaneseq
  %v1821 = vand.u32 %v1820, 127
  %s1822 = smul.u32 0, 128
  %v1823 = vstv %s1822
  %v1824 = vadd.s32 %v1821, %v1823
  %vm1825 = vcmp.lt.s32.totalorder %v1824, 6
  %v1826 = vsel %vm1825, 1, 0
  %v1827 = vcvt.s32.f32 %v1826
  %v1828 = vmul.f32 %v1771, %v1740
  %v1829 = vsel %vm1749, %v1828, 0.0
  %v1830 = vrot.slane %v1829, 4
  %v1831 = vadd.f32 %v1829, %v1830
  %v1832 = vrot.slane %v1831, 2
  %v1833 = vadd.f32 %v1831, %v1832
  %v1834 = vrot.slane %v1833, 1
  %v1835 = vadd.f32 %v1833, %v1834
  %v1836 = vmul.f32 %v1835, %v1827
  %v1837 = vmul.f32 %v1836, 0.0069444445
  %v1838 = vmul.f32 %v1819, %v1744
  %v1839 = vsel %vm1749, %v1838, 0.0
  %v1840 = vrot.slane %v1839, 4
  %v1841 = vadd.f32 %v1839, %v1840
  %v1842 = vrot.slane %v1841, 2
  %v1843 = vadd.f32 %v1841, %v1842
  %v1844 = vrot.slane %v1843, 1
  %v1845 = vadd.f32 %v1843, %v1844
  %v1846 = vmul.f32 %v1845, %v1827
  %v1847 = vmul.f32 %v1846, 0.0069444445
  %v1848 = vld [vmem:[#allocation2 + $0x180] sm:$0x7]
  %v1849 = vmul.f32 %v1727, -0.083333336
  %v1850 = vsel %vm1749, %v1849, -inf
  %v1851 = vrot.slane %v1850, 4
  %v1852 = vmax.f32 %v1850, %v1851
  %v1853 = vrot.slane %v1852, 2
  %v1854 = vmax.f32 %v1852, %v1853
  %v1855 = vrot.slane %v1854, 1
  %v1856 = vmax.f32 %v1854, %v1855
  %v1857 = vsub.f32 %v1849, %v1856
  %v1858 = vmul.f32 %v1857, 1.442695
  %v1859 = vpow.pop %v1858
  %v1860 = vsel %vm1749, %v1859, 0.0
  %v1861 = vrot.slane %v1860, 4
  %v1862 = vadd.f32 %v1860, %v1861
  %v1863 = vrot.slane %v1862, 2
  %v1864 = vadd.f32 %v1862, %v1863
  %v1865 = vrot.slane %v1864, 1
  %v1866 = vadd.f32 %v1864, %v1865
  %v1867 = vrcp.pop %v1866
  %v1868 = vmul.f32 %v1866, %v1867
  %v1869 = vsub.f32 1.0, %v1868
  %v1870 = vmul.f32 %v1867, %v1869
  %v1871 = vadd.f32 %v1867, %v1870
  %vm1872 = vweird.f32 %v1866
  %vm1873 = vweird.f32 %v1867
  %vm1874 = vmor %vm1872, %vm1873
  %v1875 = vsel %vm1874, %v1867, %v1871
  %v1876 = vand.u32 2147483647, %v1866
  %vm1877 = vcmp.eq.f32.partialorder %v1876, 8.507059e+37
  %v1878 = vand.u32 %v1866, 2147483648
  %v1879 = vor.u32 1.1754944e-38, %v1878
  %v1880 = vsel %vm1877, %v1879, %v1875
  %v1881 = vmul.f32 %v1859, %v1880
  %v1882 = vsel %vm1749, %v1848, -inf
  %v1883 = vrot.slane %v1882, 4
  %v1884 = vmax.f32 %v1882, %v1883
  %v1885 = vrot.slane %v1884, 2
  %v1886 = vmax.f32 %v1884, %v1885
  %v1887 = vrot.slane %v1886, 1
  %v1888 = vmax.f32 %v1886, %v1887
  %v1889 = vsub.f32 %v1848, %v1888
  %v1890 = vmul.f32 %v1889, 1.442695
  %v1891 = vpow.pop %v1890
  %v1892 = vsel %vm1749, %v1891, 0.0
  %v1893 = vrot.slane %v1892, 4
  %v1894 = vadd.f32 %v1892, %v1893
  %v1895 = vrot.slane %v1894, 2
  %v1896 = vadd.f32 %v1894, %v1895
  %v1897 = vrot.slane %v1896, 1
  %v1898 = vadd.f32 %v1896, %v1897
  %v1899 = vlog2.pop %v1898
  %v1900 = vmul.f32 %v1899, 0.6931472
  %v1901 = vadd.f32 %v1888, %v1900
  %v1902 = vsub.f32 0.0, %v1881
  %v1903 = vsub.f32 %v1848, %v1901
  %v1904 = vmul.f32 %v1902, %v1903
  %v1905 = vsel %vm1749, %v1904, 0.0
  %v1906 = vrot.slane %v1905, 4
  %v1907 = vadd.f32 %v1905, %v1906
  %v1908 = vrot.slane %v1907, 2
  %v1909 = vadd.f32 %v1907, %v1908
  %v1910 = vrot.slane %v1909, 1
  %v1911 = vadd.f32 %v1909, %v1910
  %v1912 = vmul.f32 %v1911, %v1827
  %v1913 = vmul.f32 %v1912, 0.16666667
  %v1914 = vsel %vm1724, %v1837, %v1913
  %v1915 = vsel %vm1726, %v1914, %v1847
  %1916 = vst [vmem:[%s7] sm:$0x7] %v1915
  %v1917 = vld [vmem:[#allocation2] sm:$0xff]
  %v1918 = vld [vmem:[#allocation2 + $0x8] sm:$0xf]
  %v1919 = vperm.slane %v1771, 0
  %v1920 = vmul.f32 %v1919, %v1917
  %v1921 = vmul.f32 %v1919, %v1918
  %v1922 = vadd.f32 %v1920, 0.0
  %v1923 = vadd.f32 %v1921, 0.0
  %v1924 = vld [vmem:[#allocation2 + $0x10] sm:$0xff]
  %v1925 = vld [vmem:[#allocation2 + $0x18] sm:$0xf]
  %v1926 = vperm.slane %v1771, 1
  %v1927 = vmul.f32 %v1926, %v1924
  %v1928 = vmul.f32 %v1926, %v1925
  %v1929 = vadd.f32 %v1922, %v1927
  %v1930 = vadd.f32 %v1923, %v1928
  %v1931 = vld [vmem:[#allocation2 + $0x20] sm:$0xff]
  %v1932 = vld [vmem:[#allocation2 + $0x28] sm:$0xf]
  %v1933 = vperm.slane %v1771, 2
  %v1934 = vmul.f32 %v1933, %v1931
  %v1935 = vmul.f32 %v1933, %v1932
  %v1936 = vadd.f32 %v1929, %v1934
  %v1937 = vadd.f32 %v1930, %v1935
  %1938 = vst [vmem:[%s8] sm:$0xff] %v1936
  %1939 = vst [vmem:[%s8 + $0x8] sm:$0xf] %v1937
  %v1940 = vld [vmem:[#allocation2 + $0x30] sm:$0xff]
  %v1941 = vld [vmem:[#allocation2 + $0x38] sm:$0xf]
  %v1942 = vmul.f32 %v1919, %v1940
  %v1943 = vmul.f32 %v1919, %v1941
  %v1944 = vadd.f32 %v1942, 0.0
  %v1945 = vadd.f32 %v1943, 0.0
  %v1946 = vld [vmem:[#allocation2 + $0x40] sm:$0xff]
  %v1947 = vld [vmem:[#allocation2 + $0x48] sm:$0xf]
  %v1948 = vmul.f32 %v1926, %v1946
  %v1949 = vmul.f32 %v1926, %v1947
  %v1950 = vadd.f32 %v1944, %v1948
  %v1951 = vadd.f32 %v1945, %v1949
  %v1952 = vld [vmem:[#allocation2 + $0x50] sm:$0xff]
  %v1953 = vld [vmem:[#allocation2 + $0x58] sm:$0xf]
  %v1954 = vmul.f32 %v1933, %v1952
  %v1955 = vmul.f32 %v1933, %v1953
  %v1956 = vadd.f32 %v1950, %v1954
  %v1957 = vadd.f32 %v1951, %v1955
  %s1958 = scalar_lea.vmem %s8, 16
  %1959 = vst [vmem:[%s1958] sm:$0xff] %v1956
  %1960 = vst [vmem:[%s1958 + $0x8] sm:$0xf] %v1957
  %v1961 = vld [vmem:[#allocation2] sm:$0xff]
  %v1962 = vld [vmem:[#allocation2 + $0x8] sm:$0xf]
  %v1963 = vperm.slane %v1795, 0
  %v1964 = vmul.f32 %v1963, %v1961
  %v1965 = vmul.f32 %v1963, %v1962
  %v1966 = vadd.f32 %v1964, 0.0
  %v1967 = vadd.f32 %v1965, 0.0
  %v1968 = vld [vmem:[#allocation2 + $0x10] sm:$0xff]
  %v1969 = vld [vmem:[#allocation2 + $0x18] sm:$0xf]
  %v1970 = vperm.slane %v1795, 1
  %v1971 = vmul.f32 %v1970, %v1968
  %v1972 = vmul.f32 %v1970, %v1969
  %v1973 = vadd.f32 %v1966, %v1971
  %v1974 = vadd.f32 %v1967, %v1972
  %v1975 = vld [vmem:[#allocation2 + $0x20] sm:$0xff]
  %v1976 = vld [vmem:[#allocation2 + $0x28] sm:$0xf]
  %v1977 = vperm.slane %v1795, 2
  %v1978 = vmul.f32 %v1977, %v1975
  %v1979 = vmul.f32 %v1977, %v1976
  %v1980 = vadd.f32 %v1973, %v1978
  %v1981 = vadd.f32 %v1974, %v1979
  %s1982 = scalar_lea.vmem %s8, 32
  %1983 = vst [vmem:[%s1982] sm:$0xff] %v1980
  %1984 = vst [vmem:[%s1982 + $0x8] sm:$0xf] %v1981
  %v1985 = vld [vmem:[#allocation2 + $0x30] sm:$0xff]
  %v1986 = vld [vmem:[#allocation2 + $0x38] sm:$0xf]
  %v1987 = vmul.f32 %v1963, %v1985
  %v1988 = vmul.f32 %v1963, %v1986
  %v1989 = vadd.f32 %v1987, 0.0
  %v1990 = vadd.f32 %v1988, 0.0
  %v1991 = vld [vmem:[#allocation2 + $0x40] sm:$0xff]
  %v1992 = vld [vmem:[#allocation2 + $0x48] sm:$0xf]
  %v1993 = vmul.f32 %v1970, %v1991
  %v1994 = vmul.f32 %v1970, %v1992
  %v1995 = vadd.f32 %v1989, %v1993
  %v1996 = vadd.f32 %v1990, %v1994
  %v1997 = vld [vmem:[#allocation2 + $0x50] sm:$0xff]
  %v1998 = vld [vmem:[#allocation2 + $0x58] sm:$0xf]
  %v1999 = vmul.f32 %v1977, %v1997
  %v2000 = vmul.f32 %v1977, %v1998
  %v2001 = vadd.f32 %v1995, %v1999
  %v2002 = vadd.f32 %v1996, %v2000
  %s2003 = scalar_lea.vmem %s8, 48
  %2004 = vst [vmem:[%s2003] sm:$0xff] %v2001
  %2005 = vst [vmem:[%s2003 + $0x8] sm:$0xf] %v2002
  // Predicated region
  $region30: #{tpu_custom_call.1} parent=0 // pred_check
    _
  $region31: #{tpu_custom_call.1} parent=0 // pred_check_branch
    %2007 = sbr.rel (0) target = $region33
  $region32: #{tpu_custom_call.1} parent=0 // pred_region
    _
  $region33: #{tpu_custom_call.1} parent=0 // pred_fallthru
    _
  // Predicated region
  $region34: #{tpu_custom_call.1} parent=0 // pred_check
    _
  $region35: #{tpu_custom_call.1} parent=0 // pred_check_branch
    %2009 = sbr.rel (0) target = $region37
  $region36: #{tpu_custom_call.1} parent=0 // pred_region
    _
  $region37: #{tpu_custom_call.1} parent=0 // pred_fallthru
    _
  // Predicated region
  $region38: #{tpu_custom_call.1} parent=0 // pred_check
    _
  $region39: #{tpu_custom_call.1} parent=0 // pred_check_branch
    %2011 = sbr.rel (0) target = $region41
  $region40: #{tpu_custom_call.1} parent=0 // pred_region
    _
  $region41: #{tpu_custom_call.1} parent=0 // pred_fallthru
    _
  // Predicated region
  $region42: #{tpu_custom_call.1} parent=0 // pred_check
    _
  $region43: #{tpu_custom_call.1} parent=0 // pred_check_branch
    %2013 = sbr.rel (0) target = $region45
  $region44: #{tpu_custom_call.1} parent=0 // pred_region
    _
  $region45: #{tpu_custom_call.1} parent=0 // pred_fallthru
    _

</llo_original>
